<compile_context>
chip_gen: v7x
topology: tpu7x:2x2x1
jax: 0.10.0
libtpu: 0.0.40
codegen_flags: <defaults>
</compile_context>

<pallas_src>
import jax
import jax.numpy as jnp
import numpy as np
from jax.experimental import pallas as pl
from jax.experimental.pallas import tpu as pltpu

# Hyper-parameters from the PyTorch module
INPUT_DIM = 3
HIDDEN_DIM = 32
LATENT_DIM = 3
NUM_LAYERS = 2
KSIZE = 3

LANE = 128


def _round_up(n, m):
    return ((n + m - 1) // m) * m


def _cdiv(a, b):
    return (a + b - 1) // b


LATENT_PAD = _round_up(LATENT_DIM, 8)     # pad latent rows to a full sublane group (8)


def make_kernel(lout, lchunk, num_hidden):
    """Kernel with static knowledge of conv output length, chunking and MLP depth."""
    K, Cin = KSIZE, INPUT_DIM

    def kernel(x_ref, wc_ref, bc_ref, wh_ref, bh_ref, wl_ref, bl_ref, out_ref):
        # x_ref : (L, Cin, TB)   batch on lanes
        # wc_ref: (K, H, Cin)    conv weight, wc[k,h,c] = torch_conv_w[h,c,k]
        # bc_ref: (H, 1)         conv bias
        # wh_ref: (NH, H, H)     hidden Linear weights (out, in) -- PyTorch layout
        # bh_ref: (NH, H, 1)
        # wl_ref: (LATENT_PAD, H), bl_ref: (LATENT_PAD, 1)
        # out_ref: (LATENT_PAD, TB)
        wc = wc_ref[...]                                           # tiny, resident

        # ---- Conv1d + max over length, streamed over chunks of VALID output positions ----
        # (only l in [0, Lout) is ever computed, so no length mask is needed).
        running = None
        for start in range(0, lout, lchunk):
            csize = min(lchunk, lout - start)
            acc = None                                             # (csize, H, TB)
            for k in range(K):
                xs = x_ref[start + k:start + k + csize, :, :]      # (csize, Cin, TB)
                for c in range(Cin):
                    # (csize,1,TB) * (1,H,1) -> (csize,H,TB): VPU broadcast-FMA
                    term = xs[:, c:c + 1, :] * wc[k:k + 1, :, c:c + 1]
                    acc = term if acc is None else acc + term
            cmax = jnp.max(acc, axis=0)                            # (H, TB)
            running = cmax if running is None else jnp.maximum(running, cmax)

        h = running + bc_ref[...]                                  # (H, TB) + (H, 1)

        # ---- MLP head: hidden Linear(+ReLU) layers, then latent Linear (no ReLU) ----
        for i in range(num_hidden):
            h = jnp.dot(wh_ref[i], h, preferred_element_type=jnp.float32) + bh_ref[i]
            h = jnp.maximum(h, 0.0)
        out = jnp.dot(wl_ref[...], h, preferred_element_type=jnp.float32) + bl_ref[...]
        out_ref[...] = out.astype(out_ref.dtype)                   # (LATENT_PAD, TB), lane-dense

    return kernel


def init_torch_params(key):
    """Deterministic params in the PyTorch layouts (Conv1d: (H, Cin, K), Linear: (out, in))."""
    ks = jax.random.split(key, 2 + 2 * NUM_LAYERS)
    conv_w = 0.1 * jax.random.normal(ks[0], (HIDDEN_DIM, INPUT_DIM, KSIZE), jnp.float32)
    conv_b = 0.1 * jax.random.normal(ks[1], (HIDDEN_DIM,), jnp.float32)
    hidden = []
    i = 2
    for _ in range(NUM_LAYERS - 1):
        w = 0.1 * jax.random.normal(ks[i], (HIDDEN_DIM, HIDDEN_DIM), jnp.float32); i += 1
        b = 0.1 * jax.random.normal(ks[i], (HIDDEN_DIM,), jnp.float32); i += 1
        hidden.append((w, b))
    w_lat = 0.1 * jax.random.normal(ks[i], (LATENT_DIM, HIDDEN_DIM), jnp.float32); i += 1
    b_lat = 0.1 * jax.random.normal(ks[i], (LATENT_DIM,), jnp.float32)
    return {"conv_w": conv_w, "conv_b": conv_b, "hidden": hidden, "latent": (w_lat, b_lat)}


def prep_params(pt):
    """Rearrange PyTorch-layout params into the kernel-friendly layouts."""
    wc = jnp.transpose(pt["conv_w"], (2, 0, 1))                       # (K, H, Cin)
    bc = pt["conv_b"].reshape(HIDDEN_DIM, 1)                          # (H, 1)
    wh = jnp.stack([w for (w, _) in pt["hidden"]], axis=0)            # (NH, H, H)
    bh = jnp.stack([b.reshape(HIDDEN_DIM, 1) for (_, b) in pt["hidden"]], axis=0)  # (NH, H, 1)
    w_lat, b_lat = pt["latent"]
    wl = jnp.zeros((LATENT_PAD, HIDDEN_DIM), jnp.float32).at[:LATENT_DIM].set(w_lat)
    bl = jnp.zeros((LATENT_PAD, 1), jnp.float32).at[:LATENT_DIM, 0].set(b_lat)
    return wc, bc, wh, bh, wl, bl


def encoder_conv1(x, kernel_params):
    """x: [B, L, INPUT_DIM] f32 -> [B, LATENT_DIM] f32."""
    wc, bc, wh, bh, wl, bl = kernel_params
    B, L, Cin = x.shape
    assert Cin == INPUT_DIM
    Lout = L - KSIZE + 1
    assert Lout >= 1, "sequence length must be >= kernel size"

    # Batch tile (lane axis): multiple of 128; keep >= 2 grid steps on big batches so the
    # two v7x TensorCores both get work, and keep the double-buffered x block small.
    x_bytes_per_b = L * 8 * 4                       # Cin (3) sublane-pads to 8 in VMEM
    tb_vmem = max(LANE, ((4 << 20) // (2 * x_bytes_per_b)) // LANE * LANE)
    if B <= LANE:
        TB = LANE
    else:
        TB = min(512, tb_vmem, _round_up(_cdiv(B, 2), LANE))
    Bp = _round_up(B, TB)

    # Layout plumbing in the wrapper: batch on the minor (lane) axis, no data expansion.
    xt = jnp.transpose(x, (1, 2, 0))                # (L, Cin, B)
    xt = jnp.pad(xt, ((0, 0), (0, 0), (0, Bp - B))) # (L, Cin, Bp)

    num_hidden = wh.shape[0]
    # In-kernel chunk of conv output positions: bounds the (chunk, H, TB) live temporary.
    lchunk = min(Lout, max(8, (1 << 21) // (HIDDEN_DIM * TB * 4)))
    # Note: for very long L one would add a second ("arbitrary") grid axis over L chunks;
    # at this module's scale the in-kernel chunk loop keeps the live set small enough.

    kernel = make_kernel(Lout, lchunk, num_hidden)

    flops = 2 * Bp * (Lout * HIDDEN_DIM * KSIZE * INPUT_DIM
                      + num_hidden * HIDDEN_DIM * HIDDEN_DIM
                      + HIDDEN_DIM * LATENT_DIM)
    bytes_accessed = 4 * (xt.size + wc.size + bc.size + wh.size + bh.size
                          + wl.size + bl.size + LATENT_PAD * Bp)

    out = pl.pallas_call(
        kernel,
        grid=(Bp // TB,),
        in_specs=[
            pl.BlockSpec((L, INPUT_DIM, TB), lambda i: (0, 0, i)),   # x, tiled over batch lanes
            pl.BlockSpec(wc.shape, lambda i: (0, 0, 0)),             # resident parameter blocks
            pl.BlockSpec(bc.shape, lambda i: (0, 0)),
            pl.BlockSpec(wh.shape, lambda i: (0, 0, 0)),
            pl.BlockSpec(bh.shape, lambda i: (0, 0, 0)),
            pl.BlockSpec(wl.shape, lambda i: (0, 0)),
            pl.BlockSpec(bl.shape, lambda i: (0, 0)),
        ],
        out_specs=pl.BlockSpec((LATENT_PAD, TB), lambda i: (0, i)),
        out_shape=jax.ShapeDtypeStruct((LATENT_PAD, Bp), jnp.float32),
        compiler_params=pltpu.CompilerParams(dimension_semantics=("parallel",)),
        cost_estimate=pl.CostEstimate(flops=flops, transcendentals=0,
                                      bytes_accessed=bytes_accessed),
    )(xt, wc, bc, wh, bh, wl, bl)                   # (LATENT_PAD, Bp), lane-dense store

    return out[:LATENT_DIM, :B].T                   # (B, LATENT_DIM)


def reference(x, pt):
    """Pure-JAX reference with identical semantics to the PyTorch forward."""
    B, L, _ = x.shape
    K = KSIZE
    Lout = L - K + 1
    w, b = pt["conv_w"], pt["conv_b"]
    conv = jnp.zeros((B, Lout, HIDDEN_DIM), jnp.float32)
    for k in range(K):
        conv = conv + jnp.einsum("blc,hc->blh", x[:, k:k + Lout, :], w[:, :, k])
    conv = conv + b[None, None, :]
    h = jnp.max(conv, axis=1)
    for (wl_, bl_) in pt["hidden"]:
        h = jnp.maximum(h @ wl_.T + bl_, 0.0)
    wl_, bl_ = pt["latent"]
    return h @ wl_.T + bl_


if __name__ == "__main__":
    key = jax.random.PRNGKey(0)
    pkey, xkey = jax.random.split(key)
    pt_params = init_torch_params(pkey)
    params = prep_params(pt_params)

    B, L = 2, 16
    x = jax.random.normal(xkey, (B, L, INPUT_DIM), jnp.float32)

    out = jax.block_until_ready(encoder_conv1(x, params))

    ref = reference(x, pt_params)
    assert out.shape == (B, LATENT_DIM)
    np.testing.assert_allclose(np.asarray(out), np.asarray(ref), rtol=1e-5, atol=1e-5)
    print("KERNEL_OK")
</pallas_src>

<mosaic_0001>
module attributes {stable_mosaic.version = 11 : i64} {
  func.func @kernel(%arg0: i32, %arg1: memref<16x3x128xf32, #tpu.memory_space<vmem>>, %arg2: memref<3x32x3xf32, #tpu.memory_space<vmem>>, %arg3: memref<32x1xf32, #tpu.memory_space<vmem>>, %arg4: memref<1x32x32xf32, #tpu.memory_space<vmem>>, %arg5: memref<1x32x1xf32, #tpu.memory_space<vmem>>, %arg6: memref<8x32xf32, #tpu.memory_space<vmem>>, %arg7: memref<8x1xf32, #tpu.memory_space<vmem>>, %arg8: memref<8x128xf32, #tpu.memory_space<vmem>>) attributes {dimension_semantics = [#tpu.dimension_semantics<parallel>], iteration_bounds = array<i64: 1>, scalar_prefetch = 0 : i64, scratch_operands = 0 : i64, tpu.core_type = #tpu.core_type<tc>, window_params = [{transform_indices = @transform_0, window_bounds = array<i64: 16, 3, 128>}, {pipeline_mode = #tpu.pipeline_mode<synchronous>, transform_indices = @transform_1, window_bounds = array<i64: 3, 32, 3>}, {pipeline_mode = #tpu.pipeline_mode<synchronous>, transform_indices = @transform_2, window_bounds = array<i64: 32, 1>}, {pipeline_mode = #tpu.pipeline_mode<synchronous>, transform_indices = @transform_3, window_bounds = array<i64: 1, 32, 32>}, {pipeline_mode = #tpu.pipeline_mode<synchronous>, transform_indices = @transform_4, window_bounds = array<i64: 1, 32, 1>}, {pipeline_mode = #tpu.pipeline_mode<synchronous>, transform_indices = @transform_5, window_bounds = array<i64: 8, 32>}, {pipeline_mode = #tpu.pipeline_mode<synchronous>, transform_indices = @transform_6, window_bounds = array<i64: 8, 1>}, {transform_indices = @transform_7, window_bounds = array<i64: 8, 128>}]} {
    %c0 = arith.constant 0 : index
    %c0_0 = arith.constant 0 : index
    %c0_1 = arith.constant 0 : index
    %0 = vector.load %arg2[%c0, %c0_0, %c0_1] : memref<3x32x3xf32, #tpu.memory_space<vmem>>, vector<3x32x3xf32>
    %c0_2 = arith.constant 0 : index
    %c0_3 = arith.constant 0 : index
    %c0_4 = arith.constant 0 : index
    %1 = vector.load %arg1[%c0_2, %c0_3, %c0_4] : memref<16x3x128xf32, #tpu.memory_space<vmem>>, vector<14x3x128xf32>
    %2 = vector.extract_strided_slice %1 {offsets = [0, 0, 0], sizes = [14, 1, 128], strides = [1, 1, 1]} : vector<14x3x128xf32> to vector<14x1x128xf32>
    %3 = vector.extract_strided_slice %0 {offsets = [0, 0, 0], sizes = [1, 32, 1], strides = [1, 1, 1]} : vector<3x32x3xf32> to vector<1x32x1xf32>
    %4 = vector.broadcast %2 : vector<14x1x128xf32> to vector<14x32x128xf32>
    %5 = vector.broadcast %3 : vector<1x32x1xf32> to vector<14x32x128xf32>
    %6 = arith.mulf %4, %5 : vector<14x32x128xf32>
    %7 = vector.extract_strided_slice %1 {offsets = [0, 1, 0], sizes = [14, 1, 128], strides = [1, 1, 1]} : vector<14x3x128xf32> to vector<14x1x128xf32>
    %8 = vector.extract_strided_slice %0 {offsets = [0, 0, 1], sizes = [1, 32, 1], strides = [1, 1, 1]} : vector<3x32x3xf32> to vector<1x32x1xf32>
    %9 = vector.broadcast %7 : vector<14x1x128xf32> to vector<14x32x128xf32>
    %10 = vector.broadcast %8 : vector<1x32x1xf32> to vector<14x32x128xf32>
    %11 = arith.mulf %9, %10 : vector<14x32x128xf32>
    %12 = arith.addf %6, %11 : vector<14x32x128xf32>
    %13 = vector.extract_strided_slice %1 {offsets = [0, 2, 0], sizes = [14, 1, 128], strides = [1, 1, 1]} : vector<14x3x128xf32> to vector<14x1x128xf32>
    %14 = vector.extract_strided_slice %0 {offsets = [0, 0, 2], sizes = [1, 32, 1], strides = [1, 1, 1]} : vector<3x32x3xf32> to vector<1x32x1xf32>
    %15 = vector.broadcast %13 : vector<14x1x128xf32> to vector<14x32x128xf32>
    %16 = vector.broadcast %14 : vector<1x32x1xf32> to vector<14x32x128xf32>
    %17 = arith.mulf %15, %16 : vector<14x32x128xf32>
    %18 = arith.addf %12, %17 : vector<14x32x128xf32>
    %c1 = arith.constant 1 : index
    %c0_5 = arith.constant 0 : index
    %c0_6 = arith.constant 0 : index
    %19 = vector.load %arg1[%c1, %c0_5, %c0_6] : memref<16x3x128xf32, #tpu.memory_space<vmem>>, vector<14x3x128xf32>
    %20 = vector.extract_strided_slice %19 {offsets = [0, 0, 0], sizes = [14, 1, 128], strides = [1, 1, 1]} : vector<14x3x128xf32> to vector<14x1x128xf32>
    %21 = vector.extract_strided_slice %0 {offsets = [1, 0, 0], sizes = [1, 32, 1], strides = [1, 1, 1]} : vector<3x32x3xf32> to vector<1x32x1xf32>
    %22 = vector.broadcast %20 : vector<14x1x128xf32> to vector<14x32x128xf32>
    %23 = vector.broadcast %21 : vector<1x32x1xf32> to vector<14x32x128xf32>
    %24 = arith.mulf %22, %23 : vector<14x32x128xf32>
    %25 = arith.addf %18, %24 : vector<14x32x128xf32>
    %26 = vector.extract_strided_slice %19 {offsets = [0, 1, 0], sizes = [14, 1, 128], strides = [1, 1, 1]} : vector<14x3x128xf32> to vector<14x1x128xf32>
    %27 = vector.extract_strided_slice %0 {offsets = [1, 0, 1], sizes = [1, 32, 1], strides = [1, 1, 1]} : vector<3x32x3xf32> to vector<1x32x1xf32>
    %28 = vector.broadcast %26 : vector<14x1x128xf32> to vector<14x32x128xf32>
    %29 = vector.broadcast %27 : vector<1x32x1xf32> to vector<14x32x128xf32>
    %30 = arith.mulf %28, %29 : vector<14x32x128xf32>
    %31 = arith.addf %25, %30 : vector<14x32x128xf32>
    %32 = vector.extract_strided_slice %19 {offsets = [0, 2, 0], sizes = [14, 1, 128], strides = [1, 1, 1]} : vector<14x3x128xf32> to vector<14x1x128xf32>
    %33 = vector.extract_strided_slice %0 {offsets = [1, 0, 2], sizes = [1, 32, 1], strides = [1, 1, 1]} : vector<3x32x3xf32> to vector<1x32x1xf32>
    %34 = vector.broadcast %32 : vector<14x1x128xf32> to vector<14x32x128xf32>
    %35 = vector.broadcast %33 : vector<1x32x1xf32> to vector<14x32x128xf32>
    %36 = arith.mulf %34, %35 : vector<14x32x128xf32>
    %37 = arith.addf %31, %36 : vector<14x32x128xf32>
    %c2 = arith.constant 2 : index
    %c0_7 = arith.constant 0 : index
    %c0_8 = arith.constant 0 : index
    %38 = vector.load %arg1[%c2, %c0_7, %c0_8] : memref<16x3x128xf32, #tpu.memory_space<vmem>>, vector<14x3x128xf32>
    %39 = vector.extract_strided_slice %38 {offsets = [0, 0, 0], sizes = [14, 1, 128], strides = [1, 1, 1]} : vector<14x3x128xf32> to vector<14x1x128xf32>
    %40 = vector.extract_strided_slice %0 {offsets = [2, 0, 0], sizes = [1, 32, 1], strides = [1, 1, 1]} : vector<3x32x3xf32> to vector<1x32x1xf32>
    %41 = vector.broadcast %39 : vector<14x1x128xf32> to vector<14x32x128xf32>
    %42 = vector.broadcast %40 : vector<1x32x1xf32> to vector<14x32x128xf32>
    %43 = arith.mulf %41, %42 : vector<14x32x128xf32>
    %44 = arith.addf %37, %43 : vector<14x32x128xf32>
    %45 = vector.extract_strided_slice %38 {offsets = [0, 1, 0], sizes = [14, 1, 128], strides = [1, 1, 1]} : vector<14x3x128xf32> to vector<14x1x128xf32>
    %46 = vector.extract_strided_slice %0 {offsets = [2, 0, 1], sizes = [1, 32, 1], strides = [1, 1, 1]} : vector<3x32x3xf32> to vector<1x32x1xf32>
    %47 = vector.broadcast %45 : vector<14x1x128xf32> to vector<14x32x128xf32>
    %48 = vector.broadcast %46 : vector<1x32x1xf32> to vector<14x32x128xf32>
    %49 = arith.mulf %47, %48 : vector<14x32x128xf32>
    %50 = arith.addf %44, %49 : vector<14x32x128xf32>
    %51 = vector.extract_strided_slice %38 {offsets = [0, 2, 0], sizes = [14, 1, 128], strides = [1, 1, 1]} : vector<14x3x128xf32> to vector<14x1x128xf32>
    %52 = vector.extract_strided_slice %0 {offsets = [2, 0, 2], sizes = [1, 32, 1], strides = [1, 1, 1]} : vector<3x32x3xf32> to vector<1x32x1xf32>
    %53 = vector.broadcast %51 : vector<14x1x128xf32> to vector<14x32x128xf32>
    %54 = vector.broadcast %52 : vector<1x32x1xf32> to vector<14x32x128xf32>
    %55 = arith.mulf %53, %54 : vector<14x32x128xf32>
    %56 = arith.addf %50, %55 : vector<14x32x128xf32>
    %cst = arith.constant dense<0xFF800000> : vector<32x128xf32>
    %57 = vector.multi_reduction <maximumf>, %56, %cst [0] : vector<14x32x128xf32> to vector<32x128xf32>
    %c0_9 = arith.constant 0 : index
    %c0_10 = arith.constant 0 : index
    %58 = vector.load %arg3[%c0_9, %c0_10] : memref<32x1xf32, #tpu.memory_space<vmem>>, vector<32x1xf32>
    %59 = vector.broadcast %58 : vector<32x1xf32> to vector<32x128xf32>
    %60 = arith.addf %57, %59 : vector<32x128xf32>
    %c0_11 = arith.constant 0 : index
    %c0_12 = arith.constant 0 : index
    %c0_13 = arith.constant 0 : index
    %61 = vector.load %arg4[%c0_11, %c0_12, %c0_13] : memref<1x32x32xf32, #tpu.memory_space<vmem>>, vector<1x32x32xf32>
    %62 = vector.shape_cast %61 : vector<1x32x32xf32> to vector<32x32xf32>
    %cst_14 = arith.constant dense<0.000000e+00> : vector<32x128xf32>
    %63 = tpu.matmul %62, %60, %cst_14 {dimension_numbers = #tpu.dot_dimension_numbers<[1], [0], [0], [1], [0, 0, 1, 1], [], []>} : vector<32x32xf32>, vector<32x128xf32>, vector<32x128xf32> -> vector<32x128xf32>
    %c0_15 = arith.constant 0 : index
    %c0_16 = arith.constant 0 : index
    %c0_17 = arith.constant 0 : index
    %64 = vector.load %arg5[%c0_15, %c0_16, %c0_17] : memref<1x32x1xf32, #tpu.memory_space<vmem>>, vector<1x32x1xf32>
    %65 = vector.shape_cast %64 : vector<1x32x1xf32> to vector<32x1xf32>
    %66 = vector.broadcast %65 : vector<32x1xf32> to vector<32x128xf32>
    %67 = arith.addf %63, %66 : vector<32x128xf32>
    %cst_18 = arith.constant 0.000000e+00 : f32
    %68 = vector.broadcast %cst_18 : f32 to vector<32x128xf32>
    %69 = arith.maximumf %67, %68 : vector<32x128xf32>
    %c0_19 = arith.constant 0 : index
    %c0_20 = arith.constant 0 : index
    %70 = vector.load %arg6[%c0_19, %c0_20] : memref<8x32xf32, #tpu.memory_space<vmem>>, vector<8x32xf32>
    %cst_21 = arith.constant dense<0.000000e+00> : vector<8x128xf32>
    %71 = tpu.matmul %70, %69, %cst_21 {dimension_numbers = #tpu.dot_dimension_numbers<[1], [0], [0], [1], [0, 0, 1, 1], [], []>} : vector<8x32xf32>, vector<32x128xf32>, vector<8x128xf32> -> vector<8x128xf32>
    %c0_22 = arith.constant 0 : index
    %c0_23 = arith.constant 0 : index
    %72 = vector.load %arg7[%c0_22, %c0_23] : memref<8x1xf32, #tpu.memory_space<vmem>>, vector<8x1xf32>
    %73 = vector.broadcast %72 : vector<8x1xf32> to vector<8x128xf32>
    %74 = arith.addf %71, %73 : vector<8x128xf32>
    %c0_24 = arith.constant 0 : index
    %c0_25 = arith.constant 0 : index
    %75 = vector.load %arg8[%c0_24, %c0_25] : memref<8x128xf32, #tpu.memory_space<vmem>>, vector<8x128xf32>
    tpu.vector_store %arg8[%c0_24, %c0_25], %74 {strides = array<i32>} : memref<8x128xf32, #tpu.memory_space<vmem>>, vector<8x128xf32>,
    return
  }
  func.func @transform_0(%arg0: i32) -> (i32, i32, i32) {
    %c0_i32 = arith.constant 0 : i32
    %c0_i32_0 = arith.constant 0 : i32
    %c0_i32_1 = arith.constant 0 : i32
    return %c0_i32, %c0_i32_0, %arg0 : i32, i32, i32
  }
  func.func @transform_1(%arg0: i32) -> (i32, i32, i32) {
    %c0_i32 = arith.constant 0 : i32
    %c0_i32_0 = arith.constant 0 : i32
    %c0_i32_1 = arith.constant 0 : i32
    %c0_i32_2 = arith.constant 0 : i32
    return %c0_i32, %c0_i32_0, %c0_i32_1 : i32, i32, i32
  }
  func.func @transform_2(%arg0: i32) -> (i32, i32) {
    %c0_i32 = arith.constant 0 : i32
    %c0_i32_0 = arith.constant 0 : i32
    %c0_i32_1 = arith.constant 0 : i32
    return %c0_i32, %c0_i32_0 : i32, i32
  }
  func.func @transform_3(%arg0: i32) -> (i32, i32, i32) {
    %c0_i32 = arith.constant 0 : i32
    %c0_i32_0 = arith.constant 0 : i32
    %c0_i32_1 = arith.constant 0 : i32
    %c0_i32_2 = arith.constant 0 : i32
    return %c0_i32, %c0_i32_0, %c0_i32_1 : i32, i32, i32
  }
  func.func @transform_4(%arg0: i32) -> (i32, i32, i32) {
    %c0_i32 = arith.constant 0 : i32
    %c0_i32_0 = arith.constant 0 : i32
    %c0_i32_1 = arith.constant 0 : i32
    %c0_i32_2 = arith.constant 0 : i32
    return %c0_i32, %c0_i32_0, %c0_i32_1 : i32, i32, i32
  }
  func.func @transform_5(%arg0: i32) -> (i32, i32) {
    %c0_i32 = arith.constant 0 : i32
    %c0_i32_0 = arith.constant 0 : i32
    %c0_i32_1 = arith.constant 0 : i32
    return %c0_i32, %c0_i32_0 : i32, i32
  }
  func.func @transform_6(%arg0: i32) -> (i32, i32) {
    %c0_i32 = arith.constant 0 : i32
    %c0_i32_0 = arith.constant 0 : i32
    %c0_i32_1 = arith.constant 0 : i32
    return %c0_i32, %c0_i32_0 : i32, i32
  }
  func.func @transform_7(%arg0: i32) -> (i32, i32) {
    %c0_i32 = arith.constant 0 : i32
    %c0_i32_0 = arith.constant 0 : i32
    return %c0_i32, %arg0 : i32, i32
  }
}

</mosaic_0001>

<llo_original>
// kernel: tpu_custom_call.1
$region0: #{tpu_custom_call.1}
  #allocation0 [shape = 'u32[]', space=smem, size = 0x4, offset = 0x4, fixed_abs, tag = 'smem constant byte address 0x4 - core index']
  #allocation1 [shape = 'u32[144,128]{1,0:T(1,128)}', space=vmem, size = 0x12000, scoped, tag = 'internal scratch']
  %s0 = inlined_call_operand.vmem [shape: f32[16,3,128], index: 0, kind: input, shape index: {}]
  %s1 = inlined_call_operand.vmem [shape: f32[3,32,3], index: 1, kind: input, shape index: {}]
  %s2 = inlined_call_operand.vmem [shape: f32[32,1], index: 2, kind: input, shape index: {}]
  %s3 = inlined_call_operand.vmem [shape: f32[1,32,32], index: 3, kind: input, shape index: {}]
  %s4 = inlined_call_operand.vmem [shape: f32[1,32,1], index: 4, kind: input, shape index: {}]
  %s5 = inlined_call_operand.vmem [shape: f32[8,32], index: 5, kind: input, shape index: {}]
  %s6 = inlined_call_operand.vmem [shape: f32[8,1], index: 6, kind: input, shape index: {}]
  %s7 = inlined_call_operand.hbm [shape: f32[8,128], index: 7, kind: output, shape index: {}]
  %s8 = sld [smem:[#allocation0]]
  $region38: #{tpu_custom_call.1} parent=0
    _
  %s10 = ssub.s32 1, %s8
  %s11 = scalar_select 0, %s10, %s8
  $region1: #{tpu_custom_call.1} parent=0
    #allocation2 [shape = 'u8[4096]{0}', space=vmem, size = 0x1000, scoped, tag = 'output window, operand 0, single buffered']
    #allocation3 [shape = 's32[1]{0}', space=sflag, size = 0x4, scoped, tag = 'scoped memory for tpu_custom_call.1']
    %12 = vsyncpa [#allocation3], 0
    // Predicated region
    $region2: #{tpu_custom_call.1} parent=1 // pred_check
      _
    $region3: #{tpu_custom_call.1} parent=1 // pred_check_branch
      %14 = sbr.rel (0) target = $region5
    $region4: #{tpu_custom_call.1} parent=1 // pred_region
      _
    $region5: #{tpu_custom_call.1} parent=1 // pred_fallthru
      _
    // Predicated region
    $region6: #{tpu_custom_call.1} parent=1 // pred_check
      _
    $region7: #{tpu_custom_call.1} parent=1 // pred_check_branch
      %16 = sbr.rel (0) target = $region9
    $region8: #{tpu_custom_call.1} parent=1 // pred_region
      _
    $region9: #{tpu_custom_call.1} parent=1 // pred_fallthru
      _
    // Predicated region
    $region10: #{tpu_custom_call.1} parent=1 // pred_check
      _
    $region11: #{tpu_custom_call.1} parent=1 // pred_check_branch
      %18 = sbr.rel (0) target = $region13
    $region12: #{tpu_custom_call.1} parent=1 // pred_region
      _
    $region13: #{tpu_custom_call.1} parent=1 // pred_fallthru
      _
    // Predicated region
    $region14: #{tpu_custom_call.1} parent=1 // pred_check
      _
    $region15: #{tpu_custom_call.1} parent=1 // pred_check_branch
      %20 = sbr.rel (0) target = $region17
    $region16: #{tpu_custom_call.1} parent=1 // pred_region
      _
    $region17: #{tpu_custom_call.1} parent=1 // pred_fallthru
      _
    // Predicated region
    $region18: #{tpu_custom_call.1} parent=1 // pred_check
      _
    $region19: #{tpu_custom_call.1} parent=1 // pred_check_branch
      %22 = sbr.rel (0) target = $region21
    $region20: #{tpu_custom_call.1} parent=1 // pred_region
      _
    $region21: #{tpu_custom_call.1} parent=1 // pred_fallthru
      _
    // Predicated region
    $region22: #{tpu_custom_call.1} parent=1 // pred_check
      _
    $region23: #{tpu_custom_call.1} parent=1 // pred_check_branch
      %24 = sbr.rel (0) target = $region25
    $region24: #{tpu_custom_call.1} parent=1 // pred_region
      _
    $region25: #{tpu_custom_call.1} parent=1 // pred_fallthru
      _
    // Predicated region
    $region26: #{tpu_custom_call.1} parent=1 // pred_check
      _
    $region27: #{tpu_custom_call.1} parent=1 // pred_check_branch
      %26 = sbr.rel (0) target = $region29
    $region28: #{tpu_custom_call.1} parent=1 // pred_region
      _
    $region29: #{tpu_custom_call.1} parent=1 // pred_fallthru
      _
    %v27 = vld [vmem:[%s1] sm:$0xff]
    %v28 = vld [vmem:[%s1 + $0x8] sm:$0xff]
    %v29 = vld [vmem:[%s1 + $0x10] sm:$0xff]
    %v30 = vld [vmem:[%s1 + $0x18] sm:$0xff]
    %v31 = vld [vmem:[%s1 + $0x20] sm:$0xff]
    %v32 = vld [vmem:[%s1 + $0x28] sm:$0xff]
    %v33 = vld [vmem:[%s1 + $0x30] sm:$0xff]
    %v34 = vld [vmem:[%s1 + $0x38] sm:$0xff]
    %v35 = vld [vmem:[%s1 + $0x40] sm:$0xff]
    %v36 = vld [vmem:[%s1 + $0x48] sm:$0xff]
    %v37 = vld [vmem:[%s1 + $0x50] sm:$0xff]
    %v38 = vld [vmem:[%s1 + $0x58] sm:$0xff]
    %v39 = vld [vmem:[%s0] sm:$0x7]
    %v40 = vld [vmem:[%s0 + $0x4] sm:$0x7]
    %v41 = vld [vmem:[%s0 + $0x8] sm:$0x7]
    %v42 = vld [vmem:[%s0 + $0xc] sm:$0x7]
    %v43 = vld [vmem:[%s0 + $0x10] sm:$0x7]
    %v44 = vld [vmem:[%s0 + $0x14] sm:$0x7]
    %v45 = vld [vmem:[%s0 + $0x18] sm:$0x7]
    %v46 = vld [vmem:[%s0 + $0x1c] sm:$0x7]
    %v47 = vld [vmem:[%s0 + $0x20] sm:$0x7]
    %v48 = vld [vmem:[%s0 + $0x24] sm:$0x7]
    %v49 = vld [vmem:[%s0 + $0x28] sm:$0x7]
    %v50 = vld [vmem:[%s0 + $0x2c] sm:$0x7]
    %v51 = vld [vmem:[%s0 + $0x30] sm:$0x7]
    %v52 = vld [vmem:[%s0 + $0x34] sm:$0x7]
    %v53 = vlaneseq
    %v54 = vshrl.u32 %v53, 7
    %v55 = vsub.s32 0, %v54
    %v56 = vrot.slane %v39, %v55
    %v57 = vlaneseq
    %v58 = vshrl.u32 %v57, 7
    %v59 = vsub.s32 0, %v58
    %v60 = vrot.slane %v40, %v59
    %v61 = vlaneseq
    %v62 = vshrl.u32 %v61, 7
    %v63 = vsub.s32 0, %v62
    %v64 = vrot.slane %v41, %v63
    %v65 = vlaneseq
    %v66 = vshrl.u32 %v65, 7
    %v67 = vsub.s32 0, %v66
    %v68 = vrot.slane %v42, %v67
    %v69 = vlaneseq
    %v70 = vshrl.u32 %v69, 7
    %v71 = vsub.s32 0, %v70
    %v72 = vrot.slane %v43, %v71
    %v73 = vlaneseq
    %v74 = vshrl.u32 %v73, 7
    %v75 = vsub.s32 0, %v74
    %v76 = vrot.slane %v44, %v75
    %v77 = vlaneseq
    %v78 = vshrl.u32 %v77, 7
    %v79 = vsub.s32 0, %v78
    %v80 = vrot.slane %v45, %v79
    %v81 = vlaneseq
    %v82 = vshrl.u32 %v81, 7
    %v83 = vsub.s32 0, %v82
    %v84 = vrot.slane %v46, %v83
    %v85 = vlaneseq
    %v86 = vshrl.u32 %v85, 7
    %v87 = vsub.s32 0, %v86
    %v88 = vrot.slane %v47, %v87
    %v89 = vlaneseq
    %v90 = vshrl.u32 %v89, 7
    %v91 = vsub.s32 0, %v90
    %v92 = vrot.slane %v48, %v91
    %v93 = vlaneseq
    %v94 = vshrl.u32 %v93, 7
    %v95 = vsub.s32 0, %v94
    %v96 = vrot.slane %v49, %v95
    %v97 = vlaneseq
    %v98 = vshrl.u32 %v97, 7
    %v99 = vsub.s32 0, %v98
    %v100 = vrot.slane %v50, %v99
    %v101 = vlaneseq
    %v102 = vshrl.u32 %v101, 7
    %v103 = vsub.s32 0, %v102
    %v104 = vrot.slane %v51, %v103
    %v105 = vlaneseq
    %v106 = vshrl.u32 %v105, 7
    %v107 = vsub.s32 0, %v106
    %v108 = vrot.slane %v52, %v107
    %110 = vset.pattern.permute.xlu0 0
    %111 = vperm.xlu0 %110, %v27
    %v112 = vpop.permute.xlu0 %111
    %115 = vset.pattern.permute.xlu0 0
    %116 = vperm.xlu0 %115, %v28
    %v117 = vpop.permute.xlu0 %116
    %120 = vset.pattern.permute.xlu0 0
    %121 = vperm.xlu0 %120, %v29
    %v122 = vpop.permute.xlu0 %121
    %125 = vset.pattern.permute.xlu0 0
    %126 = vperm.xlu0 %125, %v30
    %v127 = vpop.permute.xlu0 %126
    %v129 = vmul.f32 %v56, %v112
    %v130 = vmul.f32 %v56, %v117
    %v131 = vmul.f32 %v56, %v122
    %v132 = vmul.f32 %v56, %v127
    %v133 = vmul.f32 %v60, %v112
    %v134 = vmul.f32 %v60, %v117
    %v135 = vmul.f32 %v60, %v122
    %v136 = vmul.f32 %v60, %v127
    %v137 = vmul.f32 %v64, %v112
    %v138 = vmul.f32 %v64, %v117
    %v139 = vmul.f32 %v64, %v122
    %v140 = vmul.f32 %v64, %v127
    %v141 = vmul.f32 %v68, %v112
    %v142 = vmul.f32 %v68, %v117
    %v143 = vmul.f32 %v68, %v122
    %v144 = vmul.f32 %v68, %v127
    %v145 = vmul.f32 %v72, %v112
    %v146 = vmul.f32 %v72, %v117
    %v147 = vmul.f32 %v72, %v122
    %v148 = vmul.f32 %v72, %v127
    %v149 = vmul.f32 %v76, %v112
    %v150 = vmul.f32 %v76, %v117
    %v151 = vmul.f32 %v76, %v122
    %v152 = vmul.f32 %v76, %v127
    %v153 = vmul.f32 %v80, %v112
    %v154 = vmul.f32 %v80, %v117
    %v155 = vmul.f32 %v80, %v122
    %v156 = vmul.f32 %v80, %v127
    %v157 = vmul.f32 %v84, %v112
    %v158 = vmul.f32 %v84, %v117
    %v159 = vmul.f32 %v84, %v122
    %v160 = vmul.f32 %v84, %v127
    %v161 = vmul.f32 %v88, %v112
    %v162 = vmul.f32 %v88, %v117
    %v163 = vmul.f32 %v88, %v122
    %v164 = vmul.f32 %v88, %v127
    %v165 = vmul.f32 %v92, %v112
    %v166 = vmul.f32 %v92, %v117
    %v167 = vmul.f32 %v92, %v122
    %v168 = vmul.f32 %v92, %v127
    %v169 = vmul.f32 %v96, %v112
    %v170 = vmul.f32 %v96, %v117
    %v171 = vmul.f32 %v96, %v122
    %v172 = vmul.f32 %v96, %v127
    %v173 = vmul.f32 %v100, %v112
    %v174 = vmul.f32 %v100, %v117
    %v175 = vmul.f32 %v100, %v122
    %v176 = vmul.f32 %v100, %v127
    %v177 = vmul.f32 %v104, %v112
    %v178 = vmul.f32 %v104, %v117
    %v179 = vmul.f32 %v104, %v122
    %v180 = vmul.f32 %v104, %v127
    %v181 = vmul.f32 %v108, %v112
    %v182 = vmul.f32 %v108, %v117
    %v183 = vmul.f32 %v108, %v122
    %v184 = vmul.f32 %v108, %v127
    %v185 = vlaneseq
    %v186 = vshrl.u32 %v185, 7
    %v187 = vsub.s32 1, %v186
    %v188 = vrot.slane %v39, %v187
    %v189 = vlaneseq
    %v190 = vshrl.u32 %v189, 7
    %v191 = vsub.s32 1, %v190
    %v192 = vrot.slane %v40, %v191
    %v193 = vlaneseq
    %v194 = vshrl.u32 %v193, 7
    %v195 = vsub.s32 1, %v194
    %v196 = vrot.slane %v41, %v195
    %v197 = vlaneseq
    %v198 = vshrl.u32 %v197, 7
    %v199 = vsub.s32 1, %v198
    %v200 = vrot.slane %v42, %v199
    %v201 = vlaneseq
    %v202 = vshrl.u32 %v201, 7
    %v203 = vsub.s32 1, %v202
    %v204 = vrot.slane %v43, %v203
    %v205 = vlaneseq
    %v206 = vshrl.u32 %v205, 7
    %v207 = vsub.s32 1, %v206
    %v208 = vrot.slane %v44, %v207
    %v209 = vlaneseq
    %v210 = vshrl.u32 %v209, 7
    %v211 = vsub.s32 1, %v210
    %v212 = vrot.slane %v45, %v211
    %v213 = vlaneseq
    %v214 = vshrl.u32 %v213, 7
    %v215 = vsub.s32 1, %v214
    %v216 = vrot.slane %v46, %v215
    %v217 = vlaneseq
    %v218 = vshrl.u32 %v217, 7
    %v219 = vsub.s32 1, %v218
    %v220 = vrot.slane %v47, %v219
    %v221 = vlaneseq
    %v222 = vshrl.u32 %v221, 7
    %v223 = vsub.s32 1, %v222
    %v224 = vrot.slane %v48, %v223
    %v225 = vlaneseq
    %v226 = vshrl.u32 %v225, 7
    %v227 = vsub.s32 1, %v226
    %v228 = vrot.slane %v49, %v227
    %v229 = vlaneseq
    %v230 = vshrl.u32 %v229, 7
    %v231 = vsub.s32 1, %v230
    %v232 = vrot.slane %v50, %v231
    %v233 = vlaneseq
    %v234 = vshrl.u32 %v233, 7
    %v235 = vsub.s32 1, %v234
    %v236 = vrot.slane %v51, %v235
    %v237 = vlaneseq
    %v238 = vshrl.u32 %v237, 7
    %v239 = vsub.s32 1, %v238
    %v240 = vrot.slane %v52, %v239
    %241 = vset.pattern.permute.xlu0 1
    %242 = vperm.xlu0 %241, %v27
    %v243 = vpop.permute.xlu0 %242
    %245 = vset.pattern.permute.xlu0 1
    %246 = vperm.xlu0 %245, %v28
    %v247 = vpop.permute.xlu0 %246
    %249 = vset.pattern.permute.xlu0 1
    %250 = vperm.xlu0 %249, %v29
    %v251 = vpop.permute.xlu0 %250
    %253 = vset.pattern.permute.xlu0 1
    %254 = vperm.xlu0 %253, %v30
    %v255 = vpop.permute.xlu0 %254
    %v257 = vmul.f32 %v188, %v243
    %v258 = vmul.f32 %v188, %v247
    %v259 = vmul.f32 %v188, %v251
    %v260 = vmul.f32 %v188, %v255
    %v261 = vmul.f32 %v192, %v243
    %v262 = vmul.f32 %v192, %v247
    %v263 = vmul.f32 %v192, %v251
    %v264 = vmul.f32 %v192, %v255
    %v265 = vmul.f32 %v196, %v243
    %v266 = vmul.f32 %v196, %v247
    %v267 = vmul.f32 %v196, %v251
    %v268 = vmul.f32 %v196, %v255
    %v269 = vmul.f32 %v200, %v243
    %v270 = vmul.f32 %v200, %v247
    %v271 = vmul.f32 %v200, %v251
    %v272 = vmul.f32 %v200, %v255
    %v273 = vmul.f32 %v204, %v243
    %v274 = vmul.f32 %v204, %v247
    %v275 = vmul.f32 %v204, %v251
    %v276 = vmul.f32 %v204, %v255
    %v277 = vmul.f32 %v208, %v243
    %v278 = vmul.f32 %v208, %v247
    %v279 = vmul.f32 %v208, %v251
    %v280 = vmul.f32 %v208, %v255
    %v281 = vmul.f32 %v212, %v243
    %v282 = vmul.f32 %v212, %v247
    %v283 = vmul.f32 %v212, %v251
    %v284 = vmul.f32 %v212, %v255
    %v285 = vmul.f32 %v216, %v243
    %v286 = vmul.f32 %v216, %v247
    %v287 = vmul.f32 %v216, %v251
    %v288 = vmul.f32 %v216, %v255
    %v289 = vmul.f32 %v220, %v243
    %v290 = vmul.f32 %v220, %v247
    %v291 = vmul.f32 %v220, %v251
    %v292 = vmul.f32 %v220, %v255
    %v293 = vmul.f32 %v224, %v243
    %v294 = vmul.f32 %v224, %v247
    %v295 = vmul.f32 %v224, %v251
    %v296 = vmul.f32 %v224, %v255
    %v297 = vmul.f32 %v228, %v243
    %v298 = vmul.f32 %v228, %v247
    %v299 = vmul.f32 %v228, %v251
    %v300 = vmul.f32 %v228, %v255
    %v301 = vmul.f32 %v232, %v243
    %v302 = vmul.f32 %v232, %v247
    %v303 = vmul.f32 %v232, %v251
    %v304 = vmul.f32 %v232, %v255
    %v305 = vmul.f32 %v236, %v243
    %v306 = vmul.f32 %v236, %v247
    %v307 = vmul.f32 %v236, %v251
    %v308 = vmul.f32 %v236, %v255
    %v309 = vmul.f32 %v240, %v243
    %v310 = vmul.f32 %v240, %v247
    %v311 = vmul.f32 %v240, %v251
    %v312 = vmul.f32 %v240, %v255
    %v313 = vadd.f32 %v129, %v257
    %v314 = vadd.f32 %v130, %v258
    %v315 = vadd.f32 %v131, %v259
    %v316 = vadd.f32 %v132, %v260
    %v317 = vadd.f32 %v133, %v261
    %v318 = vadd.f32 %v134, %v262
    %v319 = vadd.f32 %v135, %v263
    %v320 = vadd.f32 %v136, %v264
    %v321 = vadd.f32 %v137, %v265
    %v322 = vadd.f32 %v138, %v266
    %v323 = vadd.f32 %v139, %v267
    %v324 = vadd.f32 %v140, %v268
    %v325 = vadd.f32 %v141, %v269
    %v326 = vadd.f32 %v142, %v270
    %v327 = vadd.f32 %v143, %v271
    %v328 = vadd.f32 %v144, %v272
    %v329 = vadd.f32 %v145, %v273
    %v330 = vadd.f32 %v146, %v274
    %v331 = vadd.f32 %v147, %v275
    %v332 = vadd.f32 %v148, %v276
    %v333 = vadd.f32 %v149, %v277
    %v334 = vadd.f32 %v150, %v278
    %v335 = vadd.f32 %v151, %v279
    %v336 = vadd.f32 %v152, %v280
    %v337 = vadd.f32 %v153, %v281
    %v338 = vadd.f32 %v154, %v282
    %v339 = vadd.f32 %v155, %v283
    %v340 = vadd.f32 %v156, %v284
    %v341 = vadd.f32 %v157, %v285
    %v342 = vadd.f32 %v158, %v286
    %v343 = vadd.f32 %v159, %v287
    %v344 = vadd.f32 %v160, %v288
    %v345 = vadd.f32 %v161, %v289
    %v346 = vadd.f32 %v162, %v290
    %v347 = vadd.f32 %v163, %v291
    %v348 = vadd.f32 %v164, %v292
    %v349 = vadd.f32 %v165, %v293
    %v350 = vadd.f32 %v166, %v294
    %v351 = vadd.f32 %v167, %v295
    %v352 = vadd.f32 %v168, %v296
    %v353 = vadd.f32 %v169, %v297
    %v354 = vadd.f32 %v170, %v298
    %v355 = vadd.f32 %v171, %v299
    %v356 = vadd.f32 %v172, %v300
    %v357 = vadd.f32 %v173, %v301
    %v358 = vadd.f32 %v174, %v302
    %v359 = vadd.f32 %v175, %v303
    %v360 = vadd.f32 %v176, %v304
    %v361 = vadd.f32 %v177, %v305
    %v362 = vadd.f32 %v178, %v306
    %v363 = vadd.f32 %v179, %v307
    %v364 = vadd.f32 %v180, %v308
    %v365 = vadd.f32 %v181, %v309
    %v366 = vadd.f32 %v182, %v310
    %v367 = vadd.f32 %v183, %v311
    %v368 = vadd.f32 %v184, %v312
    %v369 = vlaneseq
    %v370 = vshrl.u32 %v369, 7
    %v371 = vsub.s32 2, %v370
    %v372 = vrot.slane %v39, %v371
    %v373 = vlaneseq
    %v374 = vshrl.u32 %v373, 7
    %v375 = vsub.s32 2, %v374
    %v376 = vrot.slane %v40, %v375
    %v377 = vlaneseq
    %v378 = vshrl.u32 %v377, 7
    %v379 = vsub.s32 2, %v378
    %v380 = vrot.slane %v41, %v379
    %v381 = vlaneseq
    %v382 = vshrl.u32 %v381, 7
    %v383 = vsub.s32 2, %v382
    %v384 = vrot.slane %v42, %v383
    %v385 = vlaneseq
    %v386 = vshrl.u32 %v385, 7
    %v387 = vsub.s32 2, %v386
    %v388 = vrot.slane %v43, %v387
    %v389 = vlaneseq
    %v390 = vshrl.u32 %v389, 7
    %v391 = vsub.s32 2, %v390
    %v392 = vrot.slane %v44, %v391
    %v393 = vlaneseq
    %v394 = vshrl.u32 %v393, 7
    %v395 = vsub.s32 2, %v394
    %v396 = vrot.slane %v45, %v395
    %v397 = vlaneseq
    %v398 = vshrl.u32 %v397, 7
    %v399 = vsub.s32 2, %v398
    %v400 = vrot.slane %v46, %v399
    %v401 = vlaneseq
    %v402 = vshrl.u32 %v401, 7
    %v403 = vsub.s32 2, %v402
    %v404 = vrot.slane %v47, %v403
    %v405 = vlaneseq
    %v406 = vshrl.u32 %v405, 7
    %v407 = vsub.s32 2, %v406
    %v408 = vrot.slane %v48, %v407
    %v409 = vlaneseq
    %v410 = vshrl.u32 %v409, 7
    %v411 = vsub.s32 2, %v410
    %v412 = vrot.slane %v49, %v411
    %v413 = vlaneseq
    %v414 = vshrl.u32 %v413, 7
    %v415 = vsub.s32 2, %v414
    %v416 = vrot.slane %v50, %v415
    %v417 = vlaneseq
    %v418 = vshrl.u32 %v417, 7
    %v419 = vsub.s32 2, %v418
    %v420 = vrot.slane %v51, %v419
    %v421 = vlaneseq
    %v422 = vshrl.u32 %v421, 7
    %v423 = vsub.s32 2, %v422
    %v424 = vrot.slane %v52, %v423
    %425 = vset.pattern.permute.xlu0 2
    %426 = vperm.xlu0 %425, %v27
    %v427 = vpop.permute.xlu0 %426
    %429 = vset.pattern.permute.xlu0 2
    %430 = vperm.xlu0 %429, %v28
    %v431 = vpop.permute.xlu0 %430
    %433 = vset.pattern.permute.xlu0 2
    %434 = vperm.xlu0 %433, %v29
    %v435 = vpop.permute.xlu0 %434
    %437 = vset.pattern.permute.xlu0 2
    %438 = vperm.xlu0 %437, %v30
    %v439 = vpop.permute.xlu0 %438
    %v441 = vmul.f32 %v372, %v427
    %v442 = vmul.f32 %v372, %v431
    %v443 = vmul.f32 %v372, %v435
    %v444 = vmul.f32 %v372, %v439
    %v445 = vmul.f32 %v376, %v427
    %v446 = vmul.f32 %v376, %v431
    %v447 = vmul.f32 %v376, %v435
    %v448 = vmul.f32 %v376, %v439
    %v449 = vmul.f32 %v380, %v427
    %v450 = vmul.f32 %v380, %v431
    %v451 = vmul.f32 %v380, %v435
    %v452 = vmul.f32 %v380, %v439
    %v453 = vmul.f32 %v384, %v427
    %v454 = vmul.f32 %v384, %v431
    %v455 = vmul.f32 %v384, %v435
    %v456 = vmul.f32 %v384, %v439
    %v457 = vmul.f32 %v388, %v427
    %v458 = vmul.f32 %v388, %v431
    %v459 = vmul.f32 %v388, %v435
    %v460 = vmul.f32 %v388, %v439
    %v461 = vmul.f32 %v392, %v427
    %v462 = vmul.f32 %v392, %v431
    %v463 = vmul.f32 %v392, %v435
    %v464 = vmul.f32 %v392, %v439
    %v465 = vmul.f32 %v396, %v427
    %v466 = vmul.f32 %v396, %v431
    %v467 = vmul.f32 %v396, %v435
    %v468 = vmul.f32 %v396, %v439
    %v469 = vmul.f32 %v400, %v427
    %v470 = vmul.f32 %v400, %v431
    %v471 = vmul.f32 %v400, %v435
    %v472 = vmul.f32 %v400, %v439
    %v473 = vmul.f32 %v404, %v427
    %v474 = vmul.f32 %v404, %v431
    %v475 = vmul.f32 %v404, %v435
    %v476 = vmul.f32 %v404, %v439
    %v477 = vmul.f32 %v408, %v427
    %v478 = vmul.f32 %v408, %v431
    %v479 = vmul.f32 %v408, %v435
    %v480 = vmul.f32 %v408, %v439
    %v481 = vmul.f32 %v412, %v427
    %v482 = vmul.f32 %v412, %v431
    %v483 = vmul.f32 %v412, %v435
    %v484 = vmul.f32 %v412, %v439
    %v485 = vmul.f32 %v416, %v427
    %v486 = vmul.f32 %v416, %v431
    %v487 = vmul.f32 %v416, %v435
    %v488 = vmul.f32 %v416, %v439
    %v489 = vmul.f32 %v420, %v427
    %v490 = vmul.f32 %v420, %v431
    %v491 = vmul.f32 %v420, %v435
    %v492 = vmul.f32 %v420, %v439
    %v493 = vmul.f32 %v424, %v427
    %v494 = vmul.f32 %v424, %v431
    %v495 = vmul.f32 %v424, %v435
    %v496 = vmul.f32 %v424, %v439
    %v497 = vadd.f32 %v313, %v441
    %v498 = vadd.f32 %v314, %v442
    %v499 = vadd.f32 %v315, %v443
    %v500 = vadd.f32 %v316, %v444
    %v501 = vadd.f32 %v317, %v445
    %v502 = vadd.f32 %v318, %v446
    %v503 = vadd.f32 %v319, %v447
    %v504 = vadd.f32 %v320, %v448
    %v505 = vadd.f32 %v321, %v449
    %v506 = vadd.f32 %v322, %v450
    %v507 = vadd.f32 %v323, %v451
    %v508 = vadd.f32 %v324, %v452
    %v509 = vadd.f32 %v325, %v453
    %v510 = vadd.f32 %v326, %v454
    %v511 = vadd.f32 %v327, %v455
    %v512 = vadd.f32 %v328, %v456
    %v513 = vadd.f32 %v329, %v457
    %v514 = vadd.f32 %v330, %v458
    %v515 = vadd.f32 %v331, %v459
    %v516 = vadd.f32 %v332, %v460
    %v517 = vadd.f32 %v333, %v461
    %v518 = vadd.f32 %v334, %v462
    %v519 = vadd.f32 %v335, %v463
    %v520 = vadd.f32 %v336, %v464
    %v521 = vadd.f32 %v337, %v465
    %v522 = vadd.f32 %v338, %v466
    %v523 = vadd.f32 %v339, %v467
    %v524 = vadd.f32 %v340, %v468
    %v525 = vadd.f32 %v341, %v469
    %v526 = vadd.f32 %v342, %v470
    %v527 = vadd.f32 %v343, %v471
    %v528 = vadd.f32 %v344, %v472
    %v529 = vadd.f32 %v345, %v473
    %v530 = vadd.f32 %v346, %v474
    %v531 = vadd.f32 %v347, %v475
    %v532 = vadd.f32 %v348, %v476
    %v533 = vadd.f32 %v349, %v477
    %v534 = vadd.f32 %v350, %v478
    %v535 = vadd.f32 %v351, %v479
    %v536 = vadd.f32 %v352, %v480
    %v537 = vadd.f32 %v353, %v481
    %v538 = vadd.f32 %v354, %v482
    %v539 = vadd.f32 %v355, %v483
    %v540 = vadd.f32 %v356, %v484
    %v541 = vadd.f32 %v357, %v485
    %v542 = vadd.f32 %v358, %v486
    %v543 = vadd.f32 %v359, %v487
    %v544 = vadd.f32 %v360, %v488
    %v545 = vadd.f32 %v361, %v489
    %v546 = vadd.f32 %v362, %v490
    %v547 = vadd.f32 %v363, %v491
    %v548 = vadd.f32 %v364, %v492
    %v549 = vadd.f32 %v365, %v493
    %v550 = vadd.f32 %v366, %v494
    %v551 = vadd.f32 %v367, %v495
    %v552 = vadd.f32 %v368, %v496
    %s553 = scalar_lea.vmem %s0, 4
    %v554 = vld [vmem:[%s553] sm:$0x7]
    %v555 = vld [vmem:[%s553 + $0x4] sm:$0x7]
    %v556 = vld [vmem:[%s553 + $0x8] sm:$0x7]
    %v557 = vld [vmem:[%s553 + $0xc] sm:$0x7]
    %v558 = vld [vmem:[%s553 + $0x10] sm:$0x7]
    %v559 = vld [vmem:[%s553 + $0x14] sm:$0x7]
    %v560 = vld [vmem:[%s553 + $0x18] sm:$0x7]
    %v561 = vld [vmem:[%s553 + $0x1c] sm:$0x7]
    %v562 = vld [vmem:[%s553 + $0x20] sm:$0x7]
    %v563 = vld [vmem:[%s553 + $0x24] sm:$0x7]
    %v564 = vld [vmem:[%s553 + $0x28] sm:$0x7]
    %v565 = vld [vmem:[%s553 + $0x2c] sm:$0x7]
    %v566 = vld [vmem:[%s553 + $0x30] sm:$0x7]
    %v567 = vld [vmem:[%s553 + $0x34] sm:$0x7]
    %v568 = vlaneseq
    %v569 = vshrl.u32 %v568, 7
    %v570 = vsub.s32 0, %v569
    %v571 = vrot.slane %v554, %v570
    %v572 = vlaneseq
    %v573 = vshrl.u32 %v572, 7
    %v574 = vsub.s32 0, %v573
    %v575 = vrot.slane %v555, %v574
    %v576 = vlaneseq
    %v577 = vshrl.u32 %v576, 7
    %v578 = vsub.s32 0, %v577
    %v579 = vrot.slane %v556, %v578
    %v580 = vlaneseq
    %v581 = vshrl.u32 %v580, 7
    %v582 = vsub.s32 0, %v581
    %v583 = vrot.slane %v557, %v582
    %v584 = vlaneseq
    %v585 = vshrl.u32 %v584, 7
    %v586 = vsub.s32 0, %v585
    %v587 = vrot.slane %v558, %v586
    %v588 = vlaneseq
    %v589 = vshrl.u32 %v588, 7
    %v590 = vsub.s32 0, %v589
    %v591 = vrot.slane %v559, %v590
    %v592 = vlaneseq
    %v593 = vshrl.u32 %v592, 7
    %v594 = vsub.s32 0, %v593
    %v595 = vrot.slane %v560, %v594
    %v596 = vlaneseq
    %v597 = vshrl.u32 %v596, 7
    %v598 = vsub.s32 0, %v597
    %v599 = vrot.slane %v561, %v598
    %v600 = vlaneseq
    %v601 = vshrl.u32 %v600, 7
    %v602 = vsub.s32 0, %v601
    %v603 = vrot.slane %v562, %v602
    %v604 = vlaneseq
    %v605 = vshrl.u32 %v604, 7
    %v606 = vsub.s32 0, %v605
    %v607 = vrot.slane %v563, %v606
    %v608 = vlaneseq
    %v609 = vshrl.u32 %v608, 7
    %v610 = vsub.s32 0, %v609
    %v611 = vrot.slane %v564, %v610
    %v612 = vlaneseq
    %v613 = vshrl.u32 %v612, 7
    %v614 = vsub.s32 0, %v613
    %v615 = vrot.slane %v565, %v614
    %v616 = vlaneseq
    %v617 = vshrl.u32 %v616, 7
    %v618 = vsub.s32 0, %v617
    %v619 = vrot.slane %v566, %v618
    %v620 = vlaneseq
    %v621 = vshrl.u32 %v620, 7
    %v622 = vsub.s32 0, %v621
    %v623 = vrot.slane %v567, %v622
    %625 = vset.pattern.permute.xlu0 0
    %626 = vperm.xlu0 %625, %v31
    %v627 = vpop.permute.xlu0 %626
    %630 = vset.pattern.permute.xlu0 0
    %631 = vperm.xlu0 %630, %v32
    %v632 = vpop.permute.xlu0 %631
    %635 = vset.pattern.permute.xlu0 0
    %636 = vperm.xlu0 %635, %v33
    %v637 = vpop.permute.xlu0 %636
    %640 = vset.pattern.permute.xlu0 0
    %641 = vperm.xlu0 %640, %v34
    %v642 = vpop.permute.xlu0 %641
    %v644 = vmul.f32 %v571, %v627
    %v645 = vmul.f32 %v571, %v632
    %v646 = vmul.f32 %v571, %v637
    %v647 = vmul.f32 %v571, %v642
    %v648 = vmul.f32 %v575, %v627
    %v649 = vmul.f32 %v575, %v632
    %v650 = vmul.f32 %v575, %v637
    %v651 = vmul.f32 %v575, %v642
    %v652 = vmul.f32 %v579, %v627
    %v653 = vmul.f32 %v579, %v632
    %v654 = vmul.f32 %v579, %v637
    %v655 = vmul.f32 %v579, %v642
    %v656 = vmul.f32 %v583, %v627
    %v657 = vmul.f32 %v583, %v632
    %v658 = vmul.f32 %v583, %v637
    %v659 = vmul.f32 %v583, %v642
    %v660 = vmul.f32 %v587, %v627
    %v661 = vmul.f32 %v587, %v632
    %v662 = vmul.f32 %v587, %v637
    %v663 = vmul.f32 %v587, %v642
    %v664 = vmul.f32 %v591, %v627
    %v665 = vmul.f32 %v591, %v632
    %v666 = vmul.f32 %v591, %v637
    %v667 = vmul.f32 %v591, %v642
    %v668 = vmul.f32 %v595, %v627
    %v669 = vmul.f32 %v595, %v632
    %v670 = vmul.f32 %v595, %v637
    %v671 = vmul.f32 %v595, %v642
    %v672 = vmul.f32 %v599, %v627
    %v673 = vmul.f32 %v599, %v632
    %v674 = vmul.f32 %v599, %v637
    %v675 = vmul.f32 %v599, %v642
    %v676 = vmul.f32 %v603, %v627
    %v677 = vmul.f32 %v603, %v632
    %v678 = vmul.f32 %v603, %v637
    %v679 = vmul.f32 %v603, %v642
    %v680 = vmul.f32 %v607, %v627
    %v681 = vmul.f32 %v607, %v632
    %v682 = vmul.f32 %v607, %v637
    %v683 = vmul.f32 %v607, %v642
    %v684 = vmul.f32 %v611, %v627
    %v685 = vmul.f32 %v611, %v632
    %v686 = vmul.f32 %v611, %v637
    %v687 = vmul.f32 %v611, %v642
    %v688 = vmul.f32 %v615, %v627
    %v689 = vmul.f32 %v615, %v632
    %v690 = vmul.f32 %v615, %v637
    %v691 = vmul.f32 %v615, %v642
    %v692 = vmul.f32 %v619, %v627
    %v693 = vmul.f32 %v619, %v632
    %v694 = vmul.f32 %v619, %v637
    %v695 = vmul.f32 %v619, %v642
    %v696 = vmul.f32 %v623, %v627
    %v697 = vmul.f32 %v623, %v632
    %v698 = vmul.f32 %v623, %v637
    %v699 = vmul.f32 %v623, %v642
    %v700 = vadd.f32 %v497, %v644
    %v701 = vadd.f32 %v498, %v645
    %v702 = vadd.f32 %v499, %v646
    %v703 = vadd.f32 %v500, %v647
    %v704 = vadd.f32 %v501, %v648
    %v705 = vadd.f32 %v502, %v649
    %v706 = vadd.f32 %v503, %v650
    %v707 = vadd.f32 %v504, %v651
    %v708 = vadd.f32 %v505, %v652
    %v709 = vadd.f32 %v506, %v653
    %v710 = vadd.f32 %v507, %v654
    %v711 = vadd.f32 %v508, %v655
    %v712 = vadd.f32 %v509, %v656
    %v713 = vadd.f32 %v510, %v657
    %v714 = vadd.f32 %v511, %v658
    %v715 = vadd.f32 %v512, %v659
    %v716 = vadd.f32 %v513, %v660
    %v717 = vadd.f32 %v514, %v661
    %v718 = vadd.f32 %v515, %v662
    %v719 = vadd.f32 %v516, %v663
    %v720 = vadd.f32 %v517, %v664
    %v721 = vadd.f32 %v518, %v665
    %v722 = vadd.f32 %v519, %v666
    %v723 = vadd.f32 %v520, %v667
    %v724 = vadd.f32 %v521, %v668
    %v725 = vadd.f32 %v522, %v669
    %v726 = vadd.f32 %v523, %v670
    %v727 = vadd.f32 %v524, %v671
    %v728 = vadd.f32 %v525, %v672
    %v729 = vadd.f32 %v526, %v673
    %v730 = vadd.f32 %v527, %v674
    %v731 = vadd.f32 %v528, %v675
    %v732 = vadd.f32 %v529, %v676
    %v733 = vadd.f32 %v530, %v677
    %v734 = vadd.f32 %v531, %v678
    %v735 = vadd.f32 %v532, %v679
    %v736 = vadd.f32 %v533, %v680
    %v737 = vadd.f32 %v534, %v681
    %v738 = vadd.f32 %v535, %v682
    %v739 = vadd.f32 %v536, %v683
    %v740 = vadd.f32 %v537, %v684
    %v741 = vadd.f32 %v538, %v685
    %v742 = vadd.f32 %v539, %v686
    %v743 = vadd.f32 %v540, %v687
    %v744 = vadd.f32 %v541, %v688
    %v745 = vadd.f32 %v542, %v689
    %v746 = vadd.f32 %v543, %v690
    %v747 = vadd.f32 %v544, %v691
    %v748 = vadd.f32 %v545, %v692
    %v749 = vadd.f32 %v546, %v693
    %v750 = vadd.f32 %v547, %v694
    %v751 = vadd.f32 %v548, %v695
    %v752 = vadd.f32 %v549, %v696
    %v753 = vadd.f32 %v550, %v697
    %v754 = vadd.f32 %v551, %v698
    %v755 = vadd.f32 %v552, %v699
    %v756 = vlaneseq
    %v757 = vshrl.u32 %v756, 7
    %v758 = vsub.s32 1, %v757
    %v759 = vrot.slane %v554, %v758
    %v760 = vlaneseq
    %v761 = vshrl.u32 %v760, 7
    %v762 = vsub.s32 1, %v761
    %v763 = vrot.slane %v555, %v762
    %v764 = vlaneseq
    %v765 = vshrl.u32 %v764, 7
    %v766 = vsub.s32 1, %v765
    %v767 = vrot.slane %v556, %v766
    %v768 = vlaneseq
    %v769 = vshrl.u32 %v768, 7
    %v770 = vsub.s32 1, %v769
    %v771 = vrot.slane %v557, %v770
    %v772 = vlaneseq
    %v773 = vshrl.u32 %v772, 7
    %v774 = vsub.s32 1, %v773
    %v775 = vrot.slane %v558, %v774
    %v776 = vlaneseq
    %v777 = vshrl.u32 %v776, 7
    %v778 = vsub.s32 1, %v777
    %v779 = vrot.slane %v559, %v778
    %v780 = vlaneseq
    %v781 = vshrl.u32 %v780, 7
    %v782 = vsub.s32 1, %v781
    %v783 = vrot.slane %v560, %v782
    %v784 = vlaneseq
    %v785 = vshrl.u32 %v784, 7
    %v786 = vsub.s32 1, %v785
    %v787 = vrot.slane %v561, %v786
    %v788 = vlaneseq
    %v789 = vshrl.u32 %v788, 7
    %v790 = vsub.s32 1, %v789
    %v791 = vrot.slane %v562, %v790
    %v792 = vlaneseq
    %v793 = vshrl.u32 %v792, 7
    %v794 = vsub.s32 1, %v793
    %v795 = vrot.slane %v563, %v794
    %v796 = vlaneseq
    %v797 = vshrl.u32 %v796, 7
    %v798 = vsub.s32 1, %v797
    %v799 = vrot.slane %v564, %v798
    %v800 = vlaneseq
    %v801 = vshrl.u32 %v800, 7
    %v802 = vsub.s32 1, %v801
    %v803 = vrot.slane %v565, %v802
    %v804 = vlaneseq
    %v805 = vshrl.u32 %v804, 7
    %v806 = vsub.s32 1, %v805
    %v807 = vrot.slane %v566, %v806
    %v808 = vlaneseq
    %v809 = vshrl.u32 %v808, 7
    %v810 = vsub.s32 1, %v809
    %v811 = vrot.slane %v567, %v810
    %812 = vset.pattern.permute.xlu0 1
    %813 = vperm.xlu0 %812, %v31
    %v814 = vpop.permute.xlu0 %813
    %816 = vset.pattern.permute.xlu0 1
    %817 = vperm.xlu0 %816, %v32
    %v818 = vpop.permute.xlu0 %817
    %820 = vset.pattern.permute.xlu0 1
    %821 = vperm.xlu0 %820, %v33
    %v822 = vpop.permute.xlu0 %821
    %824 = vset.pattern.permute.xlu0 1
    %825 = vperm.xlu0 %824, %v34
    %v826 = vpop.permute.xlu0 %825
    %v828 = vmul.f32 %v759, %v814
    %v829 = vmul.f32 %v759, %v818
    %v830 = vmul.f32 %v759, %v822
    %v831 = vmul.f32 %v759, %v826
    %v832 = vmul.f32 %v763, %v814
    %v833 = vmul.f32 %v763, %v818
    %v834 = vmul.f32 %v763, %v822
    %v835 = vmul.f32 %v763, %v826
    %v836 = vmul.f32 %v767, %v814
    %v837 = vmul.f32 %v767, %v818
    %v838 = vmul.f32 %v767, %v822
    %v839 = vmul.f32 %v767, %v826
    %v840 = vmul.f32 %v771, %v814
    %v841 = vmul.f32 %v771, %v818
    %v842 = vmul.f32 %v771, %v822
    %v843 = vmul.f32 %v771, %v826
    %v844 = vmul.f32 %v775, %v814
    %v845 = vmul.f32 %v775, %v818
    %v846 = vmul.f32 %v775, %v822
    %v847 = vmul.f32 %v775, %v826
    %v848 = vmul.f32 %v779, %v814
    %v849 = vmul.f32 %v779, %v818
    %v850 = vmul.f32 %v779, %v822
    %v851 = vmul.f32 %v779, %v826
    %v852 = vmul.f32 %v783, %v814
    %v853 = vmul.f32 %v783, %v818
    %v854 = vmul.f32 %v783, %v822
    %v855 = vmul.f32 %v783, %v826
    %v856 = vmul.f32 %v787, %v814
    %v857 = vmul.f32 %v787, %v818
    %v858 = vmul.f32 %v787, %v822
    %v859 = vmul.f32 %v787, %v826
    %v860 = vmul.f32 %v791, %v814
    %v861 = vmul.f32 %v791, %v818
    %v862 = vmul.f32 %v791, %v822
    %v863 = vmul.f32 %v791, %v826
    %v864 = vmul.f32 %v795, %v814
    %v865 = vmul.f32 %v795, %v818
    %v866 = vmul.f32 %v795, %v822
    %v867 = vmul.f32 %v795, %v826
    %v868 = vmul.f32 %v799, %v814
    %v869 = vmul.f32 %v799, %v818
    %v870 = vmul.f32 %v799, %v822
    %v871 = vmul.f32 %v799, %v826
    %v872 = vmul.f32 %v803, %v814
    %v873 = vmul.f32 %v803, %v818
    %v874 = vmul.f32 %v803, %v822
    %v875 = vmul.f32 %v803, %v826
    %v876 = vmul.f32 %v807, %v814
    %v877 = vmul.f32 %v807, %v818
    %v878 = vmul.f32 %v807, %v822
    %v879 = vmul.f32 %v807, %v826
    %v880 = vmul.f32 %v811, %v814
    %v881 = vmul.f32 %v811, %v818
    %v882 = vmul.f32 %v811, %v822
    %v883 = vmul.f32 %v811, %v826
    %v884 = vadd.f32 %v700, %v828
    %v885 = vadd.f32 %v701, %v829
    %v886 = vadd.f32 %v702, %v830
    %v887 = vadd.f32 %v703, %v831
    %v888 = vadd.f32 %v704, %v832
    %v889 = vadd.f32 %v705, %v833
    %v890 = vadd.f32 %v706, %v834
    %v891 = vadd.f32 %v707, %v835
    %v892 = vadd.f32 %v708, %v836
    %v893 = vadd.f32 %v709, %v837
    %v894 = vadd.f32 %v710, %v838
    %v895 = vadd.f32 %v711, %v839
    %v896 = vadd.f32 %v712, %v840
    %v897 = vadd.f32 %v713, %v841
    %v898 = vadd.f32 %v714, %v842
    %v899 = vadd.f32 %v715, %v843
    %v900 = vadd.f32 %v716, %v844
    %v901 = vadd.f32 %v717, %v845
    %v902 = vadd.f32 %v718, %v846
    %v903 = vadd.f32 %v719, %v847
    %v904 = vadd.f32 %v720, %v848
    %v905 = vadd.f32 %v721, %v849
    %v906 = vadd.f32 %v722, %v850
    %v907 = vadd.f32 %v723, %v851
    %v908 = vadd.f32 %v724, %v852
    %v909 = vadd.f32 %v725, %v853
    %v910 = vadd.f32 %v726, %v854
    %v911 = vadd.f32 %v727, %v855
    %v912 = vadd.f32 %v728, %v856
    %v913 = vadd.f32 %v729, %v857
    %v914 = vadd.f32 %v730, %v858
    %v915 = vadd.f32 %v731, %v859
    %v916 = vadd.f32 %v732, %v860
    %v917 = vadd.f32 %v733, %v861
    %v918 = vadd.f32 %v734, %v862
    %v919 = vadd.f32 %v735, %v863
    %v920 = vadd.f32 %v736, %v864
    %v921 = vadd.f32 %v737, %v865
    %v922 = vadd.f32 %v738, %v866
    %v923 = vadd.f32 %v739, %v867
    %v924 = vadd.f32 %v740, %v868
    %v925 = vadd.f32 %v741, %v869
    %v926 = vadd.f32 %v742, %v870
    %v927 = vadd.f32 %v743, %v871
    %v928 = vadd.f32 %v744, %v872
    %v929 = vadd.f32 %v745, %v873
    %v930 = vadd.f32 %v746, %v874
    %v931 = vadd.f32 %v747, %v875
    %v932 = vadd.f32 %v748, %v876
    %v933 = vadd.f32 %v749, %v877
    %v934 = vadd.f32 %v750, %v878
    %v935 = vadd.f32 %v751, %v879
    %v936 = vadd.f32 %v752, %v880
    %v937 = vadd.f32 %v753, %v881
    %v938 = vadd.f32 %v754, %v882
    %v939 = vadd.f32 %v755, %v883
    %v940 = vlaneseq
    %v941 = vshrl.u32 %v940, 7
    %v942 = vsub.s32 2, %v941
    %v943 = vrot.slane %v554, %v942
    %v944 = vlaneseq
    %v945 = vshrl.u32 %v944, 7
    %v946 = vsub.s32 2, %v945
    %v947 = vrot.slane %v555, %v946
    %v948 = vlaneseq
    %v949 = vshrl.u32 %v948, 7
    %v950 = vsub.s32 2, %v949
    %v951 = vrot.slane %v556, %v950
    %v952 = vlaneseq
    %v953 = vshrl.u32 %v952, 7
    %v954 = vsub.s32 2, %v953
    %v955 = vrot.slane %v557, %v954
    %v956 = vlaneseq
    %v957 = vshrl.u32 %v956, 7
    %v958 = vsub.s32 2, %v957
    %v959 = vrot.slane %v558, %v958
    %v960 = vlaneseq
    %v961 = vshrl.u32 %v960, 7
    %v962 = vsub.s32 2, %v961
    %v963 = vrot.slane %v559, %v962
    %v964 = vlaneseq
    %v965 = vshrl.u32 %v964, 7
    %v966 = vsub.s32 2, %v965
    %v967 = vrot.slane %v560, %v966
    %v968 = vlaneseq
    %v969 = vshrl.u32 %v968, 7
    %v970 = vsub.s32 2, %v969
    %v971 = vrot.slane %v561, %v970
    %v972 = vlaneseq
    %v973 = vshrl.u32 %v972, 7
    %v974 = vsub.s32 2, %v973
    %v975 = vrot.slane %v562, %v974
    %v976 = vlaneseq
    %v977 = vshrl.u32 %v976, 7
    %v978 = vsub.s32 2, %v977
    %v979 = vrot.slane %v563, %v978
    %v980 = vlaneseq
    %v981 = vshrl.u32 %v980, 7
    %v982 = vsub.s32 2, %v981
    %v983 = vrot.slane %v564, %v982
    %v984 = vlaneseq
    %v985 = vshrl.u32 %v984, 7
    %v986 = vsub.s32 2, %v985
    %v987 = vrot.slane %v565, %v986
    %v988 = vlaneseq
    %v989 = vshrl.u32 %v988, 7
    %v990 = vsub.s32 2, %v989
    %v991 = vrot.slane %v566, %v990
    %v992 = vlaneseq
    %v993 = vshrl.u32 %v992, 7
    %v994 = vsub.s32 2, %v993
    %v995 = vrot.slane %v567, %v994
    %996 = vset.pattern.permute.xlu0 2
    %997 = vperm.xlu0 %996, %v31
    %v998 = vpop.permute.xlu0 %997
    %1000 = vset.pattern.permute.xlu0 2
    %1001 = vperm.xlu0 %1000, %v32
    %v1002 = vpop.permute.xlu0 %1001
    %1004 = vset.pattern.permute.xlu0 2
    %1005 = vperm.xlu0 %1004, %v33
    %v1006 = vpop.permute.xlu0 %1005
    %1008 = vset.pattern.permute.xlu0 2
    %1009 = vperm.xlu0 %1008, %v34
    %v1010 = vpop.permute.xlu0 %1009
    %v1012 = vmul.f32 %v943, %v998
    %v1013 = vmul.f32 %v943, %v1002
    %v1014 = vmul.f32 %v943, %v1006
    %v1015 = vmul.f32 %v943, %v1010
    %v1016 = vmul.f32 %v947, %v998
    %v1017 = vmul.f32 %v947, %v1002
    %v1018 = vmul.f32 %v947, %v1006
    %v1019 = vmul.f32 %v947, %v1010
    %v1020 = vmul.f32 %v951, %v998
    %v1021 = vmul.f32 %v951, %v1002
    %v1022 = vmul.f32 %v951, %v1006
    %v1023 = vmul.f32 %v951, %v1010
    %v1024 = vmul.f32 %v955, %v998
    %v1025 = vmul.f32 %v955, %v1002
    %v1026 = vmul.f32 %v955, %v1006
    %v1027 = vmul.f32 %v955, %v1010
    %v1028 = vmul.f32 %v959, %v998
    %v1029 = vmul.f32 %v959, %v1002
    %v1030 = vmul.f32 %v959, %v1006
    %v1031 = vmul.f32 %v959, %v1010
    %v1032 = vmul.f32 %v963, %v998
    %v1033 = vmul.f32 %v963, %v1002
    %v1034 = vmul.f32 %v963, %v1006
    %v1035 = vmul.f32 %v963, %v1010
    %v1036 = vmul.f32 %v967, %v998
    %v1037 = vmul.f32 %v967, %v1002
    %v1038 = vmul.f32 %v967, %v1006
    %v1039 = vmul.f32 %v967, %v1010
    %v1040 = vmul.f32 %v971, %v998
    %v1041 = vmul.f32 %v971, %v1002
    %v1042 = vmul.f32 %v971, %v1006
    %v1043 = vmul.f32 %v971, %v1010
    %v1044 = vmul.f32 %v975, %v998
    %v1045 = vmul.f32 %v975, %v1002
    %v1046 = vmul.f32 %v975, %v1006
    %v1047 = vmul.f32 %v975, %v1010
    %v1048 = vmul.f32 %v979, %v998
    %v1049 = vmul.f32 %v979, %v1002
    %v1050 = vmul.f32 %v979, %v1006
    %v1051 = vmul.f32 %v979, %v1010
    %v1052 = vmul.f32 %v983, %v998
    %v1053 = vmul.f32 %v983, %v1002
    %v1054 = vmul.f32 %v983, %v1006
    %v1055 = vmul.f32 %v983, %v1010
    %v1056 = vmul.f32 %v987, %v998
    %v1057 = vmul.f32 %v987, %v1002
    %v1058 = vmul.f32 %v987, %v1006
    %v1059 = vmul.f32 %v987, %v1010
    %v1060 = vmul.f32 %v991, %v998
    %v1061 = vmul.f32 %v991, %v1002
    %v1062 = vmul.f32 %v991, %v1006
    %v1063 = vmul.f32 %v991, %v1010
    %v1064 = vmul.f32 %v995, %v998
    %v1065 = vmul.f32 %v995, %v1002
    %v1066 = vmul.f32 %v995, %v1006
    %v1067 = vmul.f32 %v995, %v1010
    %v1068 = vadd.f32 %v884, %v1012
    %v1069 = vadd.f32 %v885, %v1013
    %v1070 = vadd.f32 %v886, %v1014
    %v1071 = vadd.f32 %v887, %v1015
    %v1072 = vadd.f32 %v888, %v1016
    %v1073 = vadd.f32 %v889, %v1017
    %v1074 = vadd.f32 %v890, %v1018
    %v1075 = vadd.f32 %v891, %v1019
    %v1076 = vadd.f32 %v892, %v1020
    %v1077 = vadd.f32 %v893, %v1021
    %v1078 = vadd.f32 %v894, %v1022
    %v1079 = vadd.f32 %v895, %v1023
    %v1080 = vadd.f32 %v896, %v1024
    %v1081 = vadd.f32 %v897, %v1025
    %v1082 = vadd.f32 %v898, %v1026
    %v1083 = vadd.f32 %v899, %v1027
    %v1084 = vadd.f32 %v900, %v1028
    %v1085 = vadd.f32 %v901, %v1029
    %v1086 = vadd.f32 %v902, %v1030
    %v1087 = vadd.f32 %v903, %v1031
    %v1088 = vadd.f32 %v904, %v1032
    %v1089 = vadd.f32 %v905, %v1033
    %v1090 = vadd.f32 %v906, %v1034
    %v1091 = vadd.f32 %v907, %v1035
    %v1092 = vadd.f32 %v908, %v1036
    %v1093 = vadd.f32 %v909, %v1037
    %v1094 = vadd.f32 %v910, %v1038
    %v1095 = vadd.f32 %v911, %v1039
    %v1096 = vadd.f32 %v912, %v1040
    %v1097 = vadd.f32 %v913, %v1041
    %v1098 = vadd.f32 %v914, %v1042
    %v1099 = vadd.f32 %v915, %v1043
    %v1100 = vadd.f32 %v916, %v1044
    %v1101 = vadd.f32 %v917, %v1045
    %v1102 = vadd.f32 %v918, %v1046
    %v1103 = vadd.f32 %v919, %v1047
    %v1104 = vadd.f32 %v920, %v1048
    %v1105 = vadd.f32 %v921, %v1049
    %v1106 = vadd.f32 %v922, %v1050
    %v1107 = vadd.f32 %v923, %v1051
    %v1108 = vadd.f32 %v924, %v1052
    %v1109 = vadd.f32 %v925, %v1053
    %v1110 = vadd.f32 %v926, %v1054
    %v1111 = vadd.f32 %v927, %v1055
    %v1112 = vadd.f32 %v928, %v1056
    %v1113 = vadd.f32 %v929, %v1057
    %v1114 = vadd.f32 %v930, %v1058
    %v1115 = vadd.f32 %v931, %v1059
    %v1116 = vadd.f32 %v932, %v1060
    %v1117 = vadd.f32 %v933, %v1061
    %v1118 = vadd.f32 %v934, %v1062
    %v1119 = vadd.f32 %v935, %v1063
    %v1120 = vadd.f32 %v936, %v1064
    %v1121 = vadd.f32 %v937, %v1065
    %v1122 = vadd.f32 %v938, %v1066
    %v1123 = vadd.f32 %v939, %v1067
    %s1124 = scalar_lea.vmem %s0, 8
    %v1125 = vld [vmem:[%s1124] sm:$0x7]
    %v1126 = vld [vmem:[%s1124 + $0x4] sm:$0x7]
    %v1127 = vld [vmem:[%s1124 + $0x8] sm:$0x7]
    %v1128 = vld [vmem:[%s1124 + $0xc] sm:$0x7]
    %v1129 = vld [vmem:[%s1124 + $0x10] sm:$0x7]
    %v1130 = vld [vmem:[%s1124 + $0x14] sm:$0x7]
    %v1131 = vld [vmem:[%s1124 + $0x18] sm:$0x7]
    %v1132 = vld [vmem:[%s1124 + $0x1c] sm:$0x7]
    %v1133 = vld [vmem:[%s1124 + $0x20] sm:$0x7]
    %v1134 = vld [vmem:[%s1124 + $0x24] sm:$0x7]
    %v1135 = vld [vmem:[%s1124 + $0x28] sm:$0x7]
    %v1136 = vld [vmem:[%s1124 + $0x2c] sm:$0x7]
    %v1137 = vld [vmem:[%s1124 + $0x30] sm:$0x7]
    %v1138 = vld [vmem:[%s1124 + $0x34] sm:$0x7]
    %v1139 = vlaneseq
    %v1140 = vshrl.u32 %v1139, 7
    %v1141 = vsub.s32 0, %v1140
    %v1142 = vrot.slane %v1125, %v1141
    %v1143 = vlaneseq
    %v1144 = vshrl.u32 %v1143, 7
    %v1145 = vsub.s32 0, %v1144
    %v1146 = vrot.slane %v1126, %v1145
    %v1147 = vlaneseq
    %v1148 = vshrl.u32 %v1147, 7
    %v1149 = vsub.s32 0, %v1148
    %v1150 = vrot.slane %v1127, %v1149
    %v1151 = vlaneseq
    %v1152 = vshrl.u32 %v1151, 7
    %v1153 = vsub.s32 0, %v1152
    %v1154 = vrot.slane %v1128, %v1153
    %v1155 = vlaneseq
    %v1156 = vshrl.u32 %v1155, 7
    %v1157 = vsub.s32 0, %v1156
    %v1158 = vrot.slane %v1129, %v1157
    %v1159 = vlaneseq
    %v1160 = vshrl.u32 %v1159, 7
    %v1161 = vsub.s32 0, %v1160
    %v1162 = vrot.slane %v1130, %v1161
    %v1163 = vlaneseq
    %v1164 = vshrl.u32 %v1163, 7
    %v1165 = vsub.s32 0, %v1164
    %v1166 = vrot.slane %v1131, %v1165
    %v1167 = vlaneseq
    %v1168 = vshrl.u32 %v1167, 7
    %v1169 = vsub.s32 0, %v1168
    %v1170 = vrot.slane %v1132, %v1169
    %v1171 = vlaneseq
    %v1172 = vshrl.u32 %v1171, 7
    %v1173 = vsub.s32 0, %v1172
    %v1174 = vrot.slane %v1133, %v1173
    %v1175 = vlaneseq
    %v1176 = vshrl.u32 %v1175, 7
    %v1177 = vsub.s32 0, %v1176
    %v1178 = vrot.slane %v1134, %v1177
    %v1179 = vlaneseq
    %v1180 = vshrl.u32 %v1179, 7
    %v1181 = vsub.s32 0, %v1180
    %v1182 = vrot.slane %v1135, %v1181
    %v1183 = vlaneseq
    %v1184 = vshrl.u32 %v1183, 7
    %v1185 = vsub.s32 0, %v1184
    %v1186 = vrot.slane %v1136, %v1185
    %v1187 = vlaneseq
    %v1188 = vshrl.u32 %v1187, 7
    %v1189 = vsub.s32 0, %v1188
    %v1190 = vrot.slane %v1137, %v1189
    %v1191 = vlaneseq
    %v1192 = vshrl.u32 %v1191, 7
    %v1193 = vsub.s32 0, %v1192
    %v1194 = vrot.slane %v1138, %v1193
    %1196 = vset.pattern.permute.xlu0 0
    %1197 = vperm.xlu0 %1196, %v35
    %v1198 = vpop.permute.xlu0 %1197
    %1201 = vset.pattern.permute.xlu0 0
    %1202 = vperm.xlu0 %1201, %v36
    %v1203 = vpop.permute.xlu0 %1202
    %1206 = vset.pattern.permute.xlu0 0
    %1207 = vperm.xlu0 %1206, %v37
    %v1208 = vpop.permute.xlu0 %1207
    %1211 = vset.pattern.permute.xlu0 0
    %1212 = vperm.xlu0 %1211, %v38
    %v1213 = vpop.permute.xlu0 %1212
    %v1215 = vmul.f32 %v1142, %v1198
    %v1216 = vmul.f32 %v1142, %v1203
    %v1217 = vmul.f32 %v1142, %v1208
    %v1218 = vmul.f32 %v1142, %v1213
    %v1219 = vmul.f32 %v1146, %v1198
    %v1220 = vmul.f32 %v1146, %v1203
    %v1221 = vmul.f32 %v1146, %v1208
    %v1222 = vmul.f32 %v1146, %v1213
    %v1223 = vmul.f32 %v1150, %v1198
    %v1224 = vmul.f32 %v1150, %v1203
    %v1225 = vmul.f32 %v1150, %v1208
    %v1226 = vmul.f32 %v1150, %v1213
    %v1227 = vmul.f32 %v1154, %v1198
    %v1228 = vmul.f32 %v1154, %v1203
    %v1229 = vmul.f32 %v1154, %v1208
    %v1230 = vmul.f32 %v1154, %v1213
    %v1231 = vmul.f32 %v1158, %v1198
    %v1232 = vmul.f32 %v1158, %v1203
    %v1233 = vmul.f32 %v1158, %v1208
    %v1234 = vmul.f32 %v1158, %v1213
    %v1235 = vmul.f32 %v1162, %v1198
    %v1236 = vmul.f32 %v1162, %v1203
    %v1237 = vmul.f32 %v1162, %v1208
    %v1238 = vmul.f32 %v1162, %v1213
    %v1239 = vmul.f32 %v1166, %v1198
    %v1240 = vmul.f32 %v1166, %v1203
    %v1241 = vmul.f32 %v1166, %v1208
    %v1242 = vmul.f32 %v1166, %v1213
    %v1243 = vmul.f32 %v1170, %v1198
    %v1244 = vmul.f32 %v1170, %v1203
    %v1245 = vmul.f32 %v1170, %v1208
    %v1246 = vmul.f32 %v1170, %v1213
    %v1247 = vmul.f32 %v1174, %v1198
    %v1248 = vmul.f32 %v1174, %v1203
    %v1249 = vmul.f32 %v1174, %v1208
    %v1250 = vmul.f32 %v1174, %v1213
    %v1251 = vmul.f32 %v1178, %v1198
    %v1252 = vmul.f32 %v1178, %v1203
    %v1253 = vmul.f32 %v1178, %v1208
    %v1254 = vmul.f32 %v1178, %v1213
    %v1255 = vmul.f32 %v1182, %v1198
    %v1256 = vmul.f32 %v1182, %v1203
    %v1257 = vmul.f32 %v1182, %v1208
    %v1258 = vmul.f32 %v1182, %v1213
    %v1259 = vmul.f32 %v1186, %v1198
    %v1260 = vmul.f32 %v1186, %v1203
    %v1261 = vmul.f32 %v1186, %v1208
    %v1262 = vmul.f32 %v1186, %v1213
    %v1263 = vmul.f32 %v1190, %v1198
    %v1264 = vmul.f32 %v1190, %v1203
    %v1265 = vmul.f32 %v1190, %v1208
    %v1266 = vmul.f32 %v1190, %v1213
    %v1267 = vmul.f32 %v1194, %v1198
    %v1268 = vmul.f32 %v1194, %v1203
    %v1269 = vmul.f32 %v1194, %v1208
    %v1270 = vmul.f32 %v1194, %v1213
    %v1271 = vadd.f32 %v1068, %v1215
    %v1272 = vadd.f32 %v1069, %v1216
    %v1273 = vadd.f32 %v1070, %v1217
    %v1274 = vadd.f32 %v1071, %v1218
    %v1275 = vadd.f32 %v1072, %v1219
    %v1276 = vadd.f32 %v1073, %v1220
    %v1277 = vadd.f32 %v1074, %v1221
    %v1278 = vadd.f32 %v1075, %v1222
    %v1279 = vadd.f32 %v1076, %v1223
    %v1280 = vadd.f32 %v1077, %v1224
    %v1281 = vadd.f32 %v1078, %v1225
    %v1282 = vadd.f32 %v1079, %v1226
    %v1283 = vadd.f32 %v1080, %v1227
    %v1284 = vadd.f32 %v1081, %v1228
    %v1285 = vadd.f32 %v1082, %v1229
    %v1286 = vadd.f32 %v1083, %v1230
    %v1287 = vadd.f32 %v1084, %v1231
    %v1288 = vadd.f32 %v1085, %v1232
    %v1289 = vadd.f32 %v1086, %v1233
    %v1290 = vadd.f32 %v1087, %v1234
    %v1291 = vadd.f32 %v1088, %v1235
    %v1292 = vadd.f32 %v1089, %v1236
    %v1293 = vadd.f32 %v1090, %v1237
    %v1294 = vadd.f32 %v1091, %v1238
    %v1295 = vadd.f32 %v1092, %v1239
    %v1296 = vadd.f32 %v1093, %v1240
    %v1297 = vadd.f32 %v1094, %v1241
    %v1298 = vadd.f32 %v1095, %v1242
    %v1299 = vadd.f32 %v1096, %v1243
    %v1300 = vadd.f32 %v1097, %v1244
    %v1301 = vadd.f32 %v1098, %v1245
    %v1302 = vadd.f32 %v1099, %v1246
    %v1303 = vadd.f32 %v1100, %v1247
    %v1304 = vadd.f32 %v1101, %v1248
    %v1305 = vadd.f32 %v1102, %v1249
    %v1306 = vadd.f32 %v1103, %v1250
    %v1307 = vadd.f32 %v1104, %v1251
    %v1308 = vadd.f32 %v1105, %v1252
    %v1309 = vadd.f32 %v1106, %v1253
    %v1310 = vadd.f32 %v1107, %v1254
    %v1311 = vadd.f32 %v1108, %v1255
    %v1312 = vadd.f32 %v1109, %v1256
    %v1313 = vadd.f32 %v1110, %v1257
    %v1314 = vadd.f32 %v1111, %v1258
    %v1315 = vadd.f32 %v1112, %v1259
    %v1316 = vadd.f32 %v1113, %v1260
    %v1317 = vadd.f32 %v1114, %v1261
    %v1318 = vadd.f32 %v1115, %v1262
    %v1319 = vadd.f32 %v1116, %v1263
    %v1320 = vadd.f32 %v1117, %v1264
    %v1321 = vadd.f32 %v1118, %v1265
    %v1322 = vadd.f32 %v1119, %v1266
    %v1323 = vadd.f32 %v1120, %v1267
    %v1324 = vadd.f32 %v1121, %v1268
    %v1325 = vadd.f32 %v1122, %v1269
    %v1326 = vadd.f32 %v1123, %v1270
    %v1327 = vlaneseq
    %v1328 = vshrl.u32 %v1327, 7
    %v1329 = vsub.s32 1, %v1328
    %v1330 = vrot.slane %v1125, %v1329
    %v1331 = vlaneseq
    %v1332 = vshrl.u32 %v1331, 7
    %v1333 = vsub.s32 1, %v1332
    %v1334 = vrot.slane %v1126, %v1333
    %v1335 = vlaneseq
    %v1336 = vshrl.u32 %v1335, 7
    %v1337 = vsub.s32 1, %v1336
    %v1338 = vrot.slane %v1127, %v1337
    %v1339 = vlaneseq
    %v1340 = vshrl.u32 %v1339, 7
    %v1341 = vsub.s32 1, %v1340
    %v1342 = vrot.slane %v1128, %v1341
    %v1343 = vlaneseq
    %v1344 = vshrl.u32 %v1343, 7
    %v1345 = vsub.s32 1, %v1344
    %v1346 = vrot.slane %v1129, %v1345
    %v1347 = vlaneseq
    %v1348 = vshrl.u32 %v1347, 7
    %v1349 = vsub.s32 1, %v1348
    %v1350 = vrot.slane %v1130, %v1349
    %v1351 = vlaneseq
    %v1352 = vshrl.u32 %v1351, 7
    %v1353 = vsub.s32 1, %v1352
    %v1354 = vrot.slane %v1131, %v1353
    %v1355 = vlaneseq
    %v1356 = vshrl.u32 %v1355, 7
    %v1357 = vsub.s32 1, %v1356
    %v1358 = vrot.slane %v1132, %v1357
    %v1359 = vlaneseq
    %v1360 = vshrl.u32 %v1359, 7
    %v1361 = vsub.s32 1, %v1360
    %v1362 = vrot.slane %v1133, %v1361
    %v1363 = vlaneseq
    %v1364 = vshrl.u32 %v1363, 7
    %v1365 = vsub.s32 1, %v1364
    %v1366 = vrot.slane %v1134, %v1365
    %v1367 = vlaneseq
    %v1368 = vshrl.u32 %v1367, 7
    %v1369 = vsub.s32 1, %v1368
    %v1370 = vrot.slane %v1135, %v1369
    %v1371 = vlaneseq
    %v1372 = vshrl.u32 %v1371, 7
    %v1373 = vsub.s32 1, %v1372
    %v1374 = vrot.slane %v1136, %v1373
    %v1375 = vlaneseq
    %v1376 = vshrl.u32 %v1375, 7
    %v1377 = vsub.s32 1, %v1376
    %v1378 = vrot.slane %v1137, %v1377
    %v1379 = vlaneseq
    %v1380 = vshrl.u32 %v1379, 7
    %v1381 = vsub.s32 1, %v1380
    %v1382 = vrot.slane %v1138, %v1381
    %1383 = vset.pattern.permute.xlu0 1
    %1384 = vperm.xlu0 %1383, %v35
    %v1385 = vpop.permute.xlu0 %1384
    %1387 = vset.pattern.permute.xlu0 1
    %1388 = vperm.xlu0 %1387, %v36
    %v1389 = vpop.permute.xlu0 %1388
    %1391 = vset.pattern.permute.xlu0 1
    %1392 = vperm.xlu0 %1391, %v37
    %v1393 = vpop.permute.xlu0 %1392
    %1395 = vset.pattern.permute.xlu0 1
    %1396 = vperm.xlu0 %1395, %v38
    %v1397 = vpop.permute.xlu0 %1396
    %v1399 = vmul.f32 %v1330, %v1385
    %v1400 = vmul.f32 %v1330, %v1389
    %v1401 = vmul.f32 %v1330, %v1393
    %v1402 = vmul.f32 %v1330, %v1397
    %v1403 = vmul.f32 %v1334, %v1385
    %v1404 = vmul.f32 %v1334, %v1389
    %v1405 = vmul.f32 %v1334, %v1393
    %v1406 = vmul.f32 %v1334, %v1397
    %v1407 = vmul.f32 %v1338, %v1385
    %v1408 = vmul.f32 %v1338, %v1389
    %v1409 = vmul.f32 %v1338, %v1393
    %v1410 = vmul.f32 %v1338, %v1397
    %v1411 = vmul.f32 %v1342, %v1385
    %v1412 = vmul.f32 %v1342, %v1389
    %v1413 = vmul.f32 %v1342, %v1393
    %v1414 = vmul.f32 %v1342, %v1397
    %v1415 = vmul.f32 %v1346, %v1385
    %v1416 = vmul.f32 %v1346, %v1389
    %v1417 = vmul.f32 %v1346, %v1393
    %v1418 = vmul.f32 %v1346, %v1397
    %v1419 = vmul.f32 %v1350, %v1385
    %v1420 = vmul.f32 %v1350, %v1389
    %v1421 = vmul.f32 %v1350, %v1393
    %v1422 = vmul.f32 %v1350, %v1397
    %v1423 = vmul.f32 %v1354, %v1385
    %v1424 = vmul.f32 %v1354, %v1389
    %v1425 = vmul.f32 %v1354, %v1393
    %v1426 = vmul.f32 %v1354, %v1397
    %v1427 = vmul.f32 %v1358, %v1385
    %v1428 = vmul.f32 %v1358, %v1389
    %v1429 = vmul.f32 %v1358, %v1393
    %v1430 = vmul.f32 %v1358, %v1397
    %v1431 = vmul.f32 %v1362, %v1385
    %v1432 = vmul.f32 %v1362, %v1389
    %v1433 = vmul.f32 %v1362, %v1393
    %v1434 = vmul.f32 %v1362, %v1397
    %v1435 = vmul.f32 %v1366, %v1385
    %v1436 = vmul.f32 %v1366, %v1389
    %v1437 = vmul.f32 %v1366, %v1393
    %v1438 = vmul.f32 %v1366, %v1397
    %v1439 = vmul.f32 %v1370, %v1385
    %v1440 = vmul.f32 %v1370, %v1389
    %v1441 = vmul.f32 %v1370, %v1393
    %v1442 = vmul.f32 %v1370, %v1397
    %v1443 = vmul.f32 %v1374, %v1385
    %v1444 = vmul.f32 %v1374, %v1389
    %v1445 = vmul.f32 %v1374, %v1393
    %v1446 = vmul.f32 %v1374, %v1397
    %v1447 = vmul.f32 %v1378, %v1385
    %v1448 = vmul.f32 %v1378, %v1389
    %v1449 = vmul.f32 %v1378, %v1393
    %v1450 = vmul.f32 %v1378, %v1397
    %v1451 = vmul.f32 %v1382, %v1385
    %v1452 = vmul.f32 %v1382, %v1389
    %v1453 = vmul.f32 %v1382, %v1393
    %v1454 = vmul.f32 %v1382, %v1397
    %v1455 = vadd.f32 %v1271, %v1399
    %v1456 = vadd.f32 %v1272, %v1400
    %v1457 = vadd.f32 %v1273, %v1401
    %v1458 = vadd.f32 %v1274, %v1402
    %v1459 = vadd.f32 %v1275, %v1403
    %v1460 = vadd.f32 %v1276, %v1404
    %v1461 = vadd.f32 %v1277, %v1405
    %v1462 = vadd.f32 %v1278, %v1406
    %v1463 = vadd.f32 %v1279, %v1407
    %v1464 = vadd.f32 %v1280, %v1408
    %v1465 = vadd.f32 %v1281, %v1409
    %v1466 = vadd.f32 %v1282, %v1410
    %v1467 = vadd.f32 %v1283, %v1411
    %v1468 = vadd.f32 %v1284, %v1412
    %v1469 = vadd.f32 %v1285, %v1413
    %v1470 = vadd.f32 %v1286, %v1414
    %v1471 = vadd.f32 %v1287, %v1415
    %v1472 = vadd.f32 %v1288, %v1416
    %v1473 = vadd.f32 %v1289, %v1417
    %v1474 = vadd.f32 %v1290, %v1418
    %v1475 = vadd.f32 %v1291, %v1419
    %v1476 = vadd.f32 %v1292, %v1420
    %v1477 = vadd.f32 %v1293, %v1421
    %v1478 = vadd.f32 %v1294, %v1422
    %v1479 = vadd.f32 %v1295, %v1423
    %v1480 = vadd.f32 %v1296, %v1424
    %v1481 = vadd.f32 %v1297, %v1425
    %v1482 = vadd.f32 %v1298, %v1426
    %v1483 = vadd.f32 %v1299, %v1427
    %v1484 = vadd.f32 %v1300, %v1428
    %v1485 = vadd.f32 %v1301, %v1429
    %v1486 = vadd.f32 %v1302, %v1430
    %v1487 = vadd.f32 %v1303, %v1431
    %v1488 = vadd.f32 %v1304, %v1432
    %v1489 = vadd.f32 %v1305, %v1433
    %v1490 = vadd.f32 %v1306, %v1434
    %v1491 = vadd.f32 %v1307, %v1435
    %v1492 = vadd.f32 %v1308, %v1436
    %v1493 = vadd.f32 %v1309, %v1437
    %v1494 = vadd.f32 %v1310, %v1438
    %v1495 = vadd.f32 %v1311, %v1439
    %v1496 = vadd.f32 %v1312, %v1440
    %v1497 = vadd.f32 %v1313, %v1441
    %v1498 = vadd.f32 %v1314, %v1442
    %v1499 = vadd.f32 %v1315, %v1443
    %v1500 = vadd.f32 %v1316, %v1444
    %v1501 = vadd.f32 %v1317, %v1445
    %v1502 = vadd.f32 %v1318, %v1446
    %v1503 = vadd.f32 %v1319, %v1447
    %v1504 = vadd.f32 %v1320, %v1448
    %v1505 = vadd.f32 %v1321, %v1449
    %v1506 = vadd.f32 %v1322, %v1450
    %v1507 = vadd.f32 %v1323, %v1451
    %v1508 = vadd.f32 %v1324, %v1452
    %v1509 = vadd.f32 %v1325, %v1453
    %v1510 = vadd.f32 %v1326, %v1454
    %v1511 = vlaneseq
    %v1512 = vshrl.u32 %v1511, 7
    %v1513 = vsub.s32 2, %v1512
    %v1514 = vrot.slane %v1125, %v1513
    %v1515 = vlaneseq
    %v1516 = vshrl.u32 %v1515, 7
    %v1517 = vsub.s32 2, %v1516
    %v1518 = vrot.slane %v1126, %v1517
    %v1519 = vlaneseq
    %v1520 = vshrl.u32 %v1519, 7
    %v1521 = vsub.s32 2, %v1520
    %v1522 = vrot.slane %v1127, %v1521
    %v1523 = vlaneseq
    %v1524 = vshrl.u32 %v1523, 7
    %v1525 = vsub.s32 2, %v1524
    %v1526 = vrot.slane %v1128, %v1525
    %v1527 = vlaneseq
    %v1528 = vshrl.u32 %v1527, 7
    %v1529 = vsub.s32 2, %v1528
    %v1530 = vrot.slane %v1129, %v1529
    %v1531 = vlaneseq
    %v1532 = vshrl.u32 %v1531, 7
    %v1533 = vsub.s32 2, %v1532
    %v1534 = vrot.slane %v1130, %v1533
    %v1535 = vlaneseq
    %v1536 = vshrl.u32 %v1535, 7
    %v1537 = vsub.s32 2, %v1536
    %v1538 = vrot.slane %v1131, %v1537
    %v1539 = vlaneseq
    %v1540 = vshrl.u32 %v1539, 7
    %v1541 = vsub.s32 2, %v1540
    %v1542 = vrot.slane %v1132, %v1541
    %v1543 = vlaneseq
    %v1544 = vshrl.u32 %v1543, 7
    %v1545 = vsub.s32 2, %v1544
    %v1546 = vrot.slane %v1133, %v1545
    %v1547 = vlaneseq
    %v1548 = vshrl.u32 %v1547, 7
    %v1549 = vsub.s32 2, %v1548
    %v1550 = vrot.slane %v1134, %v1549
    %v1551 = vlaneseq
    %v1552 = vshrl.u32 %v1551, 7
    %v1553 = vsub.s32 2, %v1552
    %v1554 = vrot.slane %v1135, %v1553
    %v1555 = vlaneseq
    %v1556 = vshrl.u32 %v1555, 7
    %v1557 = vsub.s32 2, %v1556
    %v1558 = vrot.slane %v1136, %v1557
    %v1559 = vlaneseq
    %v1560 = vshrl.u32 %v1559, 7
    %v1561 = vsub.s32 2, %v1560
    %v1562 = vrot.slane %v1137, %v1561
    %v1563 = vlaneseq
    %v1564 = vshrl.u32 %v1563, 7
    %v1565 = vsub.s32 2, %v1564
    %v1566 = vrot.slane %v1138, %v1565
    %1567 = vset.pattern.permute.xlu0 2
    %1568 = vperm.xlu0 %1567, %v35
    %v1569 = vpop.permute.xlu0 %1568
    %1571 = vset.pattern.permute.xlu0 2
    %1572 = vperm.xlu0 %1571, %v36
    %v1573 = vpop.permute.xlu0 %1572
    %1575 = vset.pattern.permute.xlu0 2
    %1576 = vperm.xlu0 %1575, %v37
    %v1577 = vpop.permute.xlu0 %1576
    %1579 = vset.pattern.permute.xlu0 2
    %1580 = vperm.xlu0 %1579, %v38
    %v1581 = vpop.permute.xlu0 %1580
    %v1583 = vmul.f32 %v1514, %v1569
    %v1584 = vmul.f32 %v1514, %v1573
    %v1585 = vmul.f32 %v1514, %v1577
    %v1586 = vmul.f32 %v1514, %v1581
    %v1587 = vmul.f32 %v1518, %v1569
    %v1588 = vmul.f32 %v1518, %v1573
    %v1589 = vmul.f32 %v1518, %v1577
    %v1590 = vmul.f32 %v1518, %v1581
    %v1591 = vmul.f32 %v1522, %v1569
    %v1592 = vmul.f32 %v1522, %v1573
    %v1593 = vmul.f32 %v1522, %v1577
    %v1594 = vmul.f32 %v1522, %v1581
    %v1595 = vmul.f32 %v1526, %v1569
    %v1596 = vmul.f32 %v1526, %v1573
    %v1597 = vmul.f32 %v1526, %v1577
    %v1598 = vmul.f32 %v1526, %v1581
    %v1599 = vmul.f32 %v1530, %v1569
    %v1600 = vmul.f32 %v1530, %v1573
    %v1601 = vmul.f32 %v1530, %v1577
    %v1602 = vmul.f32 %v1530, %v1581
    %v1603 = vmul.f32 %v1534, %v1569
    %v1604 = vmul.f32 %v1534, %v1573
    %v1605 = vmul.f32 %v1534, %v1577
    %v1606 = vmul.f32 %v1534, %v1581
    %v1607 = vmul.f32 %v1538, %v1569
    %v1608 = vmul.f32 %v1538, %v1573
    %v1609 = vmul.f32 %v1538, %v1577
    %v1610 = vmul.f32 %v1538, %v1581
    %v1611 = vmul.f32 %v1542, %v1569
    %v1612 = vmul.f32 %v1542, %v1573
    %v1613 = vmul.f32 %v1542, %v1577
    %v1614 = vmul.f32 %v1542, %v1581
    %v1615 = vmul.f32 %v1546, %v1569
    %v1616 = vmul.f32 %v1546, %v1573
    %v1617 = vmul.f32 %v1546, %v1577
    %v1618 = vmul.f32 %v1546, %v1581
    %v1619 = vmul.f32 %v1550, %v1569
    %v1620 = vmul.f32 %v1550, %v1573
    %v1621 = vmul.f32 %v1550, %v1577
    %v1622 = vmul.f32 %v1550, %v1581
    %v1623 = vmul.f32 %v1554, %v1569
    %v1624 = vmul.f32 %v1554, %v1573
    %v1625 = vmul.f32 %v1554, %v1577
    %v1626 = vmul.f32 %v1554, %v1581
    %v1627 = vmul.f32 %v1558, %v1569
    %v1628 = vmul.f32 %v1558, %v1573
    %v1629 = vmul.f32 %v1558, %v1577
    %v1630 = vmul.f32 %v1558, %v1581
    %v1631 = vmul.f32 %v1562, %v1569
    %v1632 = vmul.f32 %v1562, %v1573
    %v1633 = vmul.f32 %v1562, %v1577
    %v1634 = vmul.f32 %v1562, %v1581
    %v1635 = vmul.f32 %v1566, %v1569
    %v1636 = vmul.f32 %v1566, %v1573
    %v1637 = vmul.f32 %v1566, %v1577
    %v1638 = vmul.f32 %v1566, %v1581
    %v1639 = vadd.f32 %v1455, %v1583
    %v1640 = vadd.f32 %v1456, %v1584
    %v1641 = vadd.f32 %v1457, %v1585
    %v1642 = vadd.f32 %v1458, %v1586
    %v1643 = vadd.f32 %v1459, %v1587
    %v1644 = vadd.f32 %v1460, %v1588
    %v1645 = vadd.f32 %v1461, %v1589
    %v1646 = vadd.f32 %v1462, %v1590
    %v1647 = vadd.f32 %v1463, %v1591
    %v1648 = vadd.f32 %v1464, %v1592
    %v1649 = vadd.f32 %v1465, %v1593
    %v1650 = vadd.f32 %v1466, %v1594
    %v1651 = vadd.f32 %v1467, %v1595
    %v1652 = vadd.f32 %v1468, %v1596
    %v1653 = vadd.f32 %v1469, %v1597
    %v1654 = vadd.f32 %v1470, %v1598
    %v1655 = vadd.f32 %v1471, %v1599
    %v1656 = vadd.f32 %v1472, %v1600
    %v1657 = vadd.f32 %v1473, %v1601
    %v1658 = vadd.f32 %v1474, %v1602
    %v1659 = vadd.f32 %v1475, %v1603
    %v1660 = vadd.f32 %v1476, %v1604
    %v1661 = vadd.f32 %v1477, %v1605
    %v1662 = vadd.f32 %v1478, %v1606
    %v1663 = vadd.f32 %v1479, %v1607
    %v1664 = vadd.f32 %v1480, %v1608
    %v1665 = vadd.f32 %v1481, %v1609
    %v1666 = vadd.f32 %v1482, %v1610
    %v1667 = vadd.f32 %v1483, %v1611
    %v1668 = vadd.f32 %v1484, %v1612
    %v1669 = vadd.f32 %v1485, %v1613
    %v1670 = vadd.f32 %v1486, %v1614
    %v1671 = vadd.f32 %v1487, %v1615
    %v1672 = vadd.f32 %v1488, %v1616
    %v1673 = vadd.f32 %v1489, %v1617
    %v1674 = vadd.f32 %v1490, %v1618
    %v1675 = vadd.f32 %v1491, %v1619
    %v1676 = vadd.f32 %v1492, %v1620
    %v1677 = vadd.f32 %v1493, %v1621
    %v1678 = vadd.f32 %v1494, %v1622
    %v1679 = vadd.f32 %v1495, %v1623
    %v1680 = vadd.f32 %v1496, %v1624
    %v1681 = vadd.f32 %v1497, %v1625
    %v1682 = vadd.f32 %v1498, %v1626
    %v1683 = vadd.f32 %v1499, %v1627
    %v1684 = vadd.f32 %v1500, %v1628
    %v1685 = vadd.f32 %v1501, %v1629
    %v1686 = vadd.f32 %v1502, %v1630
    %v1687 = vadd.f32 %v1503, %v1631
    %v1688 = vadd.f32 %v1504, %v1632
    %v1689 = vadd.f32 %v1505, %v1633
    %v1690 = vadd.f32 %v1506, %v1634
    %v1691 = vadd.f32 %v1507, %v1635
    %v1692 = vadd.f32 %v1508, %v1636
    %v1693 = vadd.f32 %v1509, %v1637
    %v1694 = vadd.f32 %v1510, %v1638
    %v1695 = vmax.f32 %v1639, %v1643
    %v1696 = vmax.f32 %v1695, %v1647
    %v1697 = vmax.f32 %v1696, %v1651
    %v1698 = vmax.f32 %v1697, %v1655
    %v1699 = vmax.f32 %v1698, %v1659
    %v1700 = vmax.f32 %v1699, %v1663
    %v1701 = vmax.f32 %v1700, %v1667
    %v1702 = vmax.f32 %v1701, %v1671
    %v1703 = vmax.f32 %v1702, %v1675
    %v1704 = vmax.f32 %v1703, %v1679
    %v1705 = vmax.f32 %v1704, %v1683
    %v1706 = vmax.f32 %v1705, %v1687
    %v1707 = vmax.f32 %v1706, %v1691
    %v1708 = vmax.f32 %v1640, %v1644
    %v1709 = vmax.f32 %v1708, %v1648
    %v1710 = vmax.f32 %v1709, %v1652
    %v1711 = vmax.f32 %v1710, %v1656
    %v1712 = vmax.f32 %v1711, %v1660
    %v1713 = vmax.f32 %v1712, %v1664
    %v1714 = vmax.f32 %v1713, %v1668
    %v1715 = vmax.f32 %v1714, %v1672
    %v1716 = vmax.f32 %v1715, %v1676
    %v1717 = vmax.f32 %v1716, %v1680
    %v1718 = vmax.f32 %v1717, %v1684
    %v1719 = vmax.f32 %v1718, %v1688
    %v1720 = vmax.f32 %v1719, %v1692
    %v1721 = vmax.f32 %v1641, %v1645
    %v1722 = vmax.f32 %v1721, %v1649
    %v1723 = vmax.f32 %v1722, %v1653
    %v1724 = vmax.f32 %v1723, %v1657
    %v1725 = vmax.f32 %v1724, %v1661
    %v1726 = vmax.f32 %v1725, %v1665
    %v1727 = vmax.f32 %v1726, %v1669
    %v1728 = vmax.f32 %v1727, %v1673
    %v1729 = vmax.f32 %v1728, %v1677
    %v1730 = vmax.f32 %v1729, %v1681
    %v1731 = vmax.f32 %v1730, %v1685
    %v1732 = vmax.f32 %v1731, %v1689
    %v1733 = vmax.f32 %v1732, %v1693
    %v1734 = vmax.f32 %v1642, %v1646
    %v1735 = vmax.f32 %v1734, %v1650
    %v1736 = vmax.f32 %v1735, %v1654
    %v1737 = vmax.f32 %v1736, %v1658
    %v1738 = vmax.f32 %v1737, %v1662
    %v1739 = vmax.f32 %v1738, %v1666
    %v1740 = vmax.f32 %v1739, %v1670
    %v1741 = vmax.f32 %v1740, %v1674
    %v1742 = vmax.f32 %v1741, %v1678
    %v1743 = vmax.f32 %v1742, %v1682
    %v1744 = vmax.f32 %v1743, %v1686
    %v1745 = vmax.f32 %v1744, %v1690
    %v1746 = vmax.f32 %v1745, %v1694
    %v1747 = vld [vmem:[%s2] sm:$0xff]
    %v1748 = vld [vmem:[%s2 + $0x8] sm:$0xff]
    %v1749 = vld [vmem:[%s2 + $0x10] sm:$0xff]
    %v1750 = vld [vmem:[%s2 + $0x18] sm:$0xff]
    %1752 = vset.pattern.permute.xlu0 0
    %1753 = vperm.xlu0 %1752, %v1747
    %v1754 = vpop.permute.xlu0 %1753
    %1757 = vset.pattern.permute.xlu0 0
    %1758 = vperm.xlu0 %1757, %v1748
    %v1759 = vpop.permute.xlu0 %1758
    %1762 = vset.pattern.permute.xlu0 0
    %1763 = vperm.xlu0 %1762, %v1749
    %v1764 = vpop.permute.xlu0 %1763
    %1767 = vset.pattern.permute.xlu0 0
    %1768 = vperm.xlu0 %1767, %v1750
    %v1769 = vpop.permute.xlu0 %1768
    %v1771 = vadd.f32 %v1707, %v1754
    %v1772 = vadd.f32 %v1720, %v1759
    %v1773 = vadd.f32 %v1733, %v1764
    %v1774 = vadd.f32 %v1746, %v1769
    %v1775 = vld [vmem:[%s3] sm:$0xff]
    %v1776 = vld [vmem:[%s3 + $0x8] sm:$0xff]
    %v1777 = vld [vmem:[%s3 + $0x10] sm:$0xff]
    %v1778 = vld [vmem:[%s3 + $0x18] sm:$0xff]
    %v1779 = vld [vmem:[%s4] sm:$0xff]
    %v1780 = vld [vmem:[%s4 + $0x8] sm:$0xff]
    %v1781 = vld [vmem:[%s4 + $0x10] sm:$0xff]
    %v1782 = vld [vmem:[%s4 + $0x18] sm:$0xff]
    %1784 = vset.pattern.permute.xlu0 0
    %1785 = vperm.xlu0 %1784, %v1779
    %v1786 = vpop.permute.xlu0 %1785
    %1789 = vset.pattern.permute.xlu0 0
    %1790 = vperm.xlu0 %1789, %v1780
    %v1791 = vpop.permute.xlu0 %1790
    %1794 = vset.pattern.permute.xlu0 0
    %1795 = vperm.xlu0 %1794, %v1781
    %v1796 = vpop.permute.xlu0 %1795
    %1799 = vset.pattern.permute.xlu0 0
    %1800 = vperm.xlu0 %1799, %v1782
    %v1801 = vpop.permute.xlu0 %1800
    %vm1803 = vcmask 261120
    %v1805 = vsel %vm1803, %v1775, 0
    %v1808 = vsel %vm1803, %v1776, 0
    %v1811 = vsel %vm1803, %v1777, 0
    %v1814 = vsel %vm1803, %v1778, 0
    %1816 = vmatprep.subr.mxu0 0.0
    %1817 = vmatpush1.msra.mxu0 %v1771
    %1818 = vmatprep.subr.mxu0 0.0
    %1819 = vmatpush1.msra.mxu0 %v1772
    %1820 = vmatprep.subr.mxu0 0.0
    %1821 = vmatpush1.msra.mxu0 %v1773
    %1822 = vmatprep.subr.mxu0 0.0
    %1823 = vmatpush1.msra.mxu0 %v1774
    %1824 = vmatprep.subr.mxu0 0.0
    %1825 = vmatpush1.msra.mxu0 0.0
    %1826 = vmatprep.subr.mxu0 0.0
    %1827 = vmatpush1.msra.mxu0 0.0
    %1828 = vmatprep.subr.mxu0 0.0
    %1829 = vmatpush1.msra.mxu0 0.0
    %1830 = vmatprep.subr.mxu0 0.0
    %1831 = vmatpush1.msra.mxu0 0.0
    %1832 = vmatprep.subr.mxu0 0.0
    %1833 = vmatpush1.msra.mxu0 0.0
    %1834 = vmatprep.subr.mxu0 0.0
    %1835 = vmatpush1.msra.mxu0 0.0
    %1836 = vmatprep.subr.mxu0 0.0
    %1837 = vmatpush1.msra.mxu0 0.0
    %1838 = vmatprep.subr.mxu0 0.0
    %1839 = vmatpush1.msra.mxu0 0.0
    %1840 = vmatprep.subr.mxu0 0.0
    %1841 = vmatpush1.msra.mxu0 0.0
    %1842 = vmatprep.subr.mxu0 0.0
    %1843 = vmatpush1.msra.mxu0 0.0
    %1844 = vmatprep.subr.mxu0 0.0
    %1845 = vmatpush1.msra.mxu0 0.0
    %1846 = vmatprep.subr.mxu0 0.0
    %1847 = vmatpush1.msra.mxu0 0.0
    %1848 = vmatprep.subr.mxu0 0.0
    %1849 = vmatpush1.msra.mxu0 0.0
    %1850 = vmatprep.subr.mxu0 0.0
    %1851 = vmatpush1.msra.mxu0 0.0
    %1852 = vmatprep.subr.mxu0 0.0
    %1853 = vmatpush1.msra.mxu0 0.0
    %1854 = vmatprep.subr.mxu0 0.0
    %1855 = vmatpush1.msra.mxu0 0.0
    %1856 = vmatprep.subr.mxu0 0.0
    %1857 = vmatpush1.msra.mxu0 0.0
    %1858 = vmatprep.subr.mxu0 0.0
    %1859 = vmatpush1.msra.mxu0 0.0
    %1860 = vmatprep.subr.mxu0 0.0
    %1861 = vmatpush1.msra.mxu0 0.0
    %1862 = vmatprep.subr.mxu0 0.0
    %1863 = vmatpush1.msra.mxu0 0.0
    %1864 = vmatprep.subr.mxu0 0.0
    %1865 = vmatpush1.msra.mxu0 0.0
    %1866 = vmatprep.subr.mxu0 0.0
    %1867 = vmatpush1.msra.mxu0 0.0
    %1868 = vmatprep.subr.mxu0 0.0
    %1869 = vmatpush1.msra.mxu0 0.0
    %1870 = vmatprep.subr.mxu0 0.0
    %1871 = vmatpush1.msra.mxu0 0.0
    %1872 = vmatprep.subr.mxu0 0.0
    %1873 = vmatpush1.msra.mxu0 0.0
    %1874 = vmatprep.subr.mxu0 0.0
    %1875 = vmatpush1.msra.mxu0 0.0
    %1876 = vmatprep.subr.mxu0 0.0
    %1877 = vmatpush1.msra.mxu0 0.0
    %1878 = vmatprep.subr.mxu0 0.0
    %1879 = vmatpush1.msra.mxu0 0.0
    %1880 = vmatprep.mubr.f32.mxu0 0.0
    %1881 = vmatmul.mubr.f32.gmra.mrb[0].mxu0 %v1805
    %v1882 = vpop.f32.mrb[0].mxu0
    %v1883 = vadd.f32 %v1786, %v1882
    %v1884 = vpop.f32.mrb[0].mxu0
    %1885 = vmatprep.mubr.f32.mxu0 0.0
    %1886 = vmatmul.mubr.f32.gmra.mrb[0].mxu0 %v1808
    %v1887 = vpop.f32.mrb[0].mxu0
    %v1888 = vadd.f32 %v1791, %v1887
    %v1889 = vpop.f32.mrb[0].mxu0
    %1890 = vmatprep.mubr.f32.mxu0 0.0
    %1891 = vmatmul.mubr.f32.gmra.mrb[0].mxu0 %v1811
    %v1892 = vpop.f32.mrb[0].mxu0
    %v1893 = vadd.f32 %v1796, %v1892
    %v1894 = vpop.f32.mrb[0].mxu0
    %1895 = vmatprep.mubr.f32.mxu0 0.0
    %1896 = vmatmul.mubr.f32.gmra.mrb[0].mxu0 %v1814
    %v1897 = vpop.f32.mrb[0].mxu0
    %v1898 = vadd.f32 %v1801, %v1897
    %v1899 = vpop.f32.mrb[0].mxu0
    %1900 = vdwg.mxu0
    %v1901 = vmax.f32 %v1883, 0.0
    %v1902 = vmax.f32 %v1888, 0.0
    %v1903 = vmax.f32 %v1893, 0.0
    %v1904 = vmax.f32 %v1898, 0.0
    %v1905 = vld [vmem:[%s5] sm:$0xff]
    %v1906 = vld [vmem:[%s6] sm:$0xff]
    %1908 = vset.pattern.permute.xlu0 0
    %1909 = vperm.xlu0 %1908, %v1906
    %v1910 = vpop.permute.xlu0 %1909
    %v1913 = vsel %vm1803, %v1905, 0
    %1915 = vmatprep.subr.mxu0 0.0
    %1916 = vmatpush1.msra.mxu0 %v1901
    %1917 = vmatprep.subr.mxu0 0.0
    %1918 = vmatpush1.msra.mxu0 %v1902
    %1919 = vmatprep.subr.mxu0 0.0
    %1920 = vmatpush1.msra.mxu0 %v1903
    %1921 = vmatprep.subr.mxu0 0.0
    %1922 = vmatpush1.msra.mxu0 %v1904
    %1923 = vmatprep.subr.mxu0 0.0
    %1924 = vmatpush1.msra.mxu0 0.0
    %1925 = vmatprep.subr.mxu0 0.0
    %1926 = vmatpush1.msra.mxu0 0.0
    %1927 = vmatprep.subr.mxu0 0.0
    %1928 = vmatpush1.msra.mxu0 0.0
    %1929 = vmatprep.subr.mxu0 0.0
    %1930 = vmatpush1.msra.mxu0 0.0
    %1931 = vmatprep.subr.mxu0 0.0
    %1932 = vmatpush1.msra.mxu0 0.0
    %1933 = vmatprep.subr.mxu0 0.0
    %1934 = vmatpush1.msra.mxu0 0.0
    %1935 = vmatprep.subr.mxu0 0.0
    %1936 = vmatpush1.msra.mxu0 0.0
    %1937 = vmatprep.subr.mxu0 0.0
    %1938 = vmatpush1.msra.mxu0 0.0
    %1939 = vmatprep.subr.mxu0 0.0
    %1940 = vmatpush1.msra.mxu0 0.0
    %1941 = vmatprep.subr.mxu0 0.0
    %1942 = vmatpush1.msra.mxu0 0.0
    %1943 = vmatprep.subr.mxu0 0.0
    %1944 = vmatpush1.msra.mxu0 0.0
    %1945 = vmatprep.subr.mxu0 0.0
    %1946 = vmatpush1.msra.mxu0 0.0
    %1947 = vmatprep.subr.mxu0 0.0
    %1948 = vmatpush1.msra.mxu0 0.0
    %1949 = vmatprep.subr.mxu0 0.0
    %1950 = vmatpush1.msra.mxu0 0.0
    %1951 = vmatprep.subr.mxu0 0.0
    %1952 = vmatpush1.msra.mxu0 0.0
    %1953 = vmatprep.subr.mxu0 0.0
    %1954 = vmatpush1.msra.mxu0 0.0
    %1955 = vmatprep.subr.mxu0 0.0
    %1956 = vmatpush1.msra.mxu0 0.0
    %1957 = vmatprep.subr.mxu0 0.0
    %1958 = vmatpush1.msra.mxu0 0.0
    %1959 = vmatprep.subr.mxu0 0.0
    %1960 = vmatpush1.msra.mxu0 0.0
    %1961 = vmatprep.subr.mxu0 0.0
    %1962 = vmatpush1.msra.mxu0 0.0
    %1963 = vmatprep.subr.mxu0 0.0
    %1964 = vmatpush1.msra.mxu0 0.0
    %1965 = vmatprep.subr.mxu0 0.0
    %1966 = vmatpush1.msra.mxu0 0.0
    %1967 = vmatprep.subr.mxu0 0.0
    %1968 = vmatpush1.msra.mxu0 0.0
    %1969 = vmatprep.subr.mxu0 0.0
    %1970 = vmatpush1.msra.mxu0 0.0
    %1971 = vmatprep.subr.mxu0 0.0
    %1972 = vmatpush1.msra.mxu0 0.0
    %1973 = vmatprep.subr.mxu0 0.0
    %1974 = vmatpush1.msra.mxu0 0.0
    %1975 = vmatprep.subr.mxu0 0.0
    %1976 = vmatpush1.msra.mxu0 0.0
    %1977 = vmatprep.subr.mxu0 0.0
    %1978 = vmatpush1.msra.mxu0 0.0
    %1979 = vmatprep.mubr.f32.mxu0 0.0
    %1980 = vmatmul.mubr.f32.gmra.mrb[0].mxu0 %v1913
    %v1981 = vpop.f32.mrb[0].mxu0
    %v1982 = vadd.f32 %v1910, %v1981
    %v1983 = vpop.f32.mrb[0].mxu0
    %1984 = vdwg.mxu0
    %1985 = vst [vmem:[#allocation2] sm:$0xff] %v1982
    // Predicated region
    $region30: #{tpu_custom_call.1} parent=1 // pred_check
      _
    $region31: #{tpu_custom_call.1} parent=1 // pred_check_branch
      %1987 = sbr.rel (0) target = $region33
    $region32: #{tpu_custom_call.1} parent=1 // pred_region
      %s1989 = ssub.s32 128, 128
      %1990 = vsyncadd [#allocation3], %s1989
      %s1992 = sshll.u32 [#allocation2], 4
      %s1993 = int_to_ptr.vmem [resolvable:$true] %s1992
      %1995 = dma.vmem_to_hbm [thread:$0]  %s1993, 128, %s7, [#allocation3]
    $region33: #{tpu_custom_call.1} parent=1 // pred_fallthru
      _
    // Predicated region
    $region34: #{tpu_custom_call.1} parent=1 // pred_check
      _
    $region35: #{tpu_custom_call.1} parent=1 // pred_check_branch
      %1997 = sbr.rel (0) target = $region37
    $region36: #{tpu_custom_call.1} parent=1 // pred_region
      %1998 = dma.done [#allocation3], 128
    $region37: #{tpu_custom_call.1} parent=1 // pred_fallthru
      _
    %1999 = vsyncpa [#allocation3], 1

</llo_original>
